<compile_context>
chip_gen: v7x
topology: tpu7x:2x2x1
jax: 0.10.0
libtpu: 0.0.40
codegen_flags: <defaults>
</compile_context>

<pallas_src>
import jax
import jax.numpy as jnp
from jax.experimental import pallas as pl
from jax.experimental.pallas import tpu as pltpu


def _aug_searcher_kernel(x_ref,       # (Btile, S)     rewards, batch-on-sublane, f32
                         wih_ref,     # (1, 4H)        W_ih^T (input_size == 1), f32
                         whh_ref,     # (H, 4H)        W_hh^T, bf16
                         b_ref,       # (1, 4H)        b_ih + b_hh, f32
                         wfc_ref,     # (H, Ap)        fc1 weight^T (lane-padded), bf16
                         bfc_ref,     # (1, Ap)        fc1 bias (pad lanes = -1e30), f32
                         probs_ref,   # (Btile, Ap)    softmax output (lane-dense)
                         hn_ref,      # (Btile, H)     final hidden state
                         cn_ref,      # (Btile, H)     final cell state
                         gx_ref):     # scratch (S, Btile, 4H) f32
    Btile, S = x_ref.shape
    H = whh_ref.shape[0]

    # Hoisted off the serial recurrence: gx[t] = x_t * W_ih^T + (b_ih + b_hh)
    # for every timestep at once, spilled to VMEM scratch so the unrolled loop
    # only keeps one (Btile, 4H) slice live at a time.
    xt = x_ref[...].T                                          # (S, Btile), once
    gx_ref[...] = (xt[:, :, None] * wih_ref[...][None, :, :]
                   + b_ref[...][None, :, :])                   # (S, Btile, 4H)

    def act_sigmoid(v):
        # 1 EUP push (tanh) instead of 2 (exp + reciprocal).  Keep f32 math
        # (v5e has no bf16 EUP/VPU).
        return 0.5 * jnp.tanh(0.5 * v) + 0.5

    def gates_to_hc(gates, c_prev, first):
        i = act_sigmoid(gates[:, 0 * H:1 * H])
        g = jnp.tanh(gates[:, 2 * H:3 * H])
        o = act_sigmoid(gates[:, 3 * H:4 * H])     # off the i/f/g -> c chain
        if first:
            c_new = i * g                           # h0 = c0 = 0: no f * c term
        else:
            f = act_sigmoid(gates[:, 1 * H:2 * H])
            c_new = f * c_prev + i * g
        h_new = o * jnp.tanh(c_new)
        return h_new, c_new

    # t = 0: gates are just gx[0] (no h @ W_hh).
    h, c = gates_to_hc(gx_ref[0], None, True)

    # Remaining timesteps, fully unrolled (S is a small static Python int).
    # whh_ref[...] is read inside the loop so the 128 KiB bf16 weight streams
    # from VMEM per step instead of living in vregs across the whole loop.
    # (Pass precision=lax.Precision.HIGHEST here if bit-closeness to the
    #  PyTorch fp32 reference ever matters.)
    for t in range(1, S):
        gates = gx_ref[t] + jnp.dot(h.astype(jnp.bfloat16), whh_ref[...],
                                    preferred_element_type=jnp.float32)
        h, c = gates_to_hc(gates, c, False)

    # fc1 + softmax on the last LSTM output (== final hidden state h).
    logits = (jnp.dot(h.astype(jnp.bfloat16), wfc_ref[...],
                      preferred_element_type=jnp.float32)
              + bfc_ref[...])
    m = jnp.max(logits, axis=-1, keepdims=True)
    e = jnp.exp(logits - m)
    inv = pl.reciprocal(jnp.sum(e, axis=-1, keepdims=True))   # exact 1/x
    probs_ref[...] = e * inv
    hn_ref[...] = h
    cn_ref[...] = c


def aug_searcher_forward(x, params, *, batch_tile=None):
    """x: (batch, seq, 1) float32.  Returns (probs, (h_n, c_n)) like the PyTorch module."""
    B, S, one = x.shape
    assert one == 1
    H = params["whh_t"].shape[0]
    A = params["wfc_t"].shape[1]
    # Gate slices inside the kernel are only lane-aligned (no relayout copies)
    # when H is a multiple of 128.
    assert H % 128 == 0, "hidden_size must be a multiple of 128"

    # Lane-dense fc output: pad num_arms up to a multiple of 128 lanes. Padded
    # arms get weight 0 and bias -1e30 -> exp underflows to 0, so they drop out
    # of the softmax; the wrapper slices them away afterwards.
    Ap = ((A + 127) // 128) * 128
    wfc_p = (jnp.zeros((H, Ap), jnp.float32)
             .at[:, :A].set(params["wfc_t"].astype(jnp.float32))
             .astype(jnp.bfloat16))                            # bf16 MXU operand
    bfc_p = jnp.full((1, Ap), -1e30, jnp.float32).at[:, :A].set(
        params["bfc"].astype(jnp.float32))

    whh_bf16 = params["whh_t"].astype(jnp.bfloat16)            # bf16 MXU operand
    wih = params["wih_t"].astype(jnp.float32)
    bias = params["bias"].astype(jnp.float32)

    # Per-block batch: >= 8 sublanes, up to 128 rows per grid step.  Pad the
    # batch so every block (and hence every hn/cn/probs store) is full.
    if batch_tile is None:
        batch_tile = min(128, ((B + 7) // 8) * 8)
    Bp = ((B + batch_tile - 1) // batch_tile) * batch_tile
    x_bs = x[..., 0].astype(jnp.float32)                       # (B, S)
    if Bp != B:
        x_bs = jnp.zeros((Bp, S), jnp.float32).at[:B].set(x_bs)
    nb = Bp // batch_tile

    grid_spec = pltpu.PrefetchScalarGridSpec(
        num_scalar_prefetch=0,
        grid=(nb,),
        in_specs=[
            pl.BlockSpec((batch_tile, S), lambda i: (i, 0)),   # x block
            pl.BlockSpec((1, 4 * H),      lambda i: (0, 0)),   # W_ih^T (resident)
            pl.BlockSpec((H, 4 * H),      lambda i: (0, 0)),   # W_hh^T (resident)
            pl.BlockSpec((1, 4 * H),      lambda i: (0, 0)),   # bias   (resident)
            pl.BlockSpec((H, Ap),         lambda i: (0, 0)),   # W_fc^T (resident)
            pl.BlockSpec((1, Ap),         lambda i: (0, 0)),   # b_fc   (resident)
        ],
        out_specs=[
            pl.BlockSpec((batch_tile, Ap), lambda i: (i, 0)),
            pl.BlockSpec((batch_tile, H),  lambda i: (i, 0)),
            pl.BlockSpec((batch_tile, H),  lambda i: (i, 0)),
        ],
        scratch_shapes=[pltpu.VMEM((S, batch_tile, 4 * H), jnp.float32)],
    )

    probs_p, h_n, c_n = pl.pallas_call(
        _aug_searcher_kernel,
        out_shape=(
            jax.ShapeDtypeStruct((Bp, Ap), jnp.float32),
            jax.ShapeDtypeStruct((Bp, H), jnp.float32),
            jax.ShapeDtypeStruct((Bp, H), jnp.float32),
        ),
        grid_spec=grid_spec,
        compiler_params=pltpu.CompilerParams(
            # Parallel batch axis -> independent blocks shard across both v7x
            # TensorCores; harmless on v5e/v6e (1 TC).
            dimension_semantics=("parallel",),
            # Explicit, conservative scoped-VMEM limit (safe on v7x's 64 MiB
            # physical VMEM as well as v5e/v6e); total footprint here is
            # well under 4 MiB even at batch_tile=128.
            vmem_limit_bytes=32 * 1024 * 1024,
        ),
    )(x_bs, wih, whh_bf16, bias, wfc_p, bfc_p)

    probs = probs_p[:B, :A]
    # PyTorch returns hidden as (num_layers=1, batch, hidden)
    hidden = (h_n[None, :B, :], c_n[None, :B, :])
    return probs, hidden


def init_params(key, num_arms, hidden_size=128):
    """Deterministic synthetic parameters matching torch.nn.LSTM(1, H) + Linear(H, A) shapes."""
    k1, k2, k3, k4, k5, k6 = jax.random.split(key, 6)
    H, A = hidden_size, num_arms
    scale = 1.0 / jnp.sqrt(jnp.float32(H))
    # torch shapes: weight_ih (4H, 1), weight_hh (4H, H), biases (4H,); fc (A, H), (A,)
    w_ih = jax.random.uniform(k1, (4 * H, 1), jnp.float32, -scale, scale)
    w_hh = jax.random.uniform(k2, (4 * H, H), jnp.float32, -scale, scale)
    b_ih = jax.random.uniform(k3, (4 * H,), jnp.float32, -scale, scale)
    b_hh = jax.random.uniform(k4, (4 * H,), jnp.float32, -scale, scale)
    w_fc = jax.random.uniform(k5, (A, H), jnp.float32, -scale, scale)
    b_fc = jax.random.uniform(k6, (A,), jnp.float32, -scale, scale)
    return {
        "wih_t": w_ih.T,                       # (1, 4H)
        "whh_t": w_hh.T,                       # (H, 4H)
        "bias": (b_ih + b_hh)[None, :],        # (1, 4H)
        "wfc_t": w_fc.T,                       # (H, A)
        "bfc": b_fc[None, :],                  # (1, A)
    }


if __name__ == "__main__":
    key = jax.random.PRNGKey(0)
    kx, kp = jax.random.split(key)

    batch, seq, hidden_size, num_arms = 2, 8, 128, 16
    x = jax.random.normal(kx, (batch, seq, 1), jnp.float32)
    params = init_params(kp, num_arms, hidden_size)

    probs, (h_n, c_n) = aug_searcher_forward(x, params)
    jax.block_until_ready((probs, h_n, c_n))

    assert probs.shape == (batch, num_arms)
    assert h_n.shape == (1, batch, hidden_size)
    assert c_n.shape == (1, batch, hidden_size)
    # Softmax rows must sum to 1 (exact reciprocal keeps this tight).
    assert bool(jnp.all(jnp.abs(jnp.sum(probs, axis=-1) - 1.0) < 1e-5))
    assert bool(jnp.all(jnp.isfinite(h_n))) and bool(jnp.all(jnp.isfinite(c_n)))
    print("KERNEL_OK")
</pallas_src>

<mosaic_0001>
module attributes {stable_mosaic.version = 11 : i64} {
  func.func @_aug_searcher_kernel(%arg0: i32, %arg1: memref<8x8xf32, #tpu.memory_space<vmem>>, %arg2: memref<1x512xf32, #tpu.memory_space<vmem>>, %arg3: memref<128x512xbf16, #tpu.memory_space<vmem>>, %arg4: memref<1x512xf32, #tpu.memory_space<vmem>>, %arg5: memref<128x128xbf16, #tpu.memory_space<vmem>>, %arg6: memref<1x128xf32, #tpu.memory_space<vmem>>, %arg7: memref<8x128xf32, #tpu.memory_space<vmem>>, %arg8: memref<8x128xf32, #tpu.memory_space<vmem>>, %arg9: memref<8x128xf32, #tpu.memory_space<vmem>>, %arg10: memref<8x8x512xf32, #tpu.memory_space<vmem>>) attributes {dimension_semantics = [#tpu.dimension_semantics<parallel>], iteration_bounds = array<i64: 1>, scalar_prefetch = 0 : i64, scratch_operands = 1 : i64, tpu.core_type = #tpu.core_type<tc>, window_params = [{transform_indices = @transform_0, window_bounds = array<i64: 8, 8>}, {pipeline_mode = #tpu.pipeline_mode<synchronous>, transform_indices = @transform_1, window_bounds = array<i64: 1, 512>}, {pipeline_mode = #tpu.pipeline_mode<synchronous>, transform_indices = @transform_2, window_bounds = array<i64: 128, 512>}, {pipeline_mode = #tpu.pipeline_mode<synchronous>, transform_indices = @transform_3, window_bounds = array<i64: 1, 512>}, {pipeline_mode = #tpu.pipeline_mode<synchronous>, transform_indices = @transform_4, window_bounds = array<i64: 128, 128>}, {pipeline_mode = #tpu.pipeline_mode<synchronous>, transform_indices = @transform_5, window_bounds = array<i64: 1, 128>}, {transform_indices = @transform_6, window_bounds = array<i64: 8, 128>}, {transform_indices = @transform_7, window_bounds = array<i64: 8, 128>}, {transform_indices = @transform_8, window_bounds = array<i64: 8, 128>}]} {
    %c0 = arith.constant 0 : index
    %c0_0 = arith.constant 0 : index
    %0 = vector.load %arg1[%c0, %c0_0] : memref<8x8xf32, #tpu.memory_space<vmem>>, vector<8x8xf32>
    %1 = tpu.transpose %0, [1, 0] : vector<8x8xf32> -> vector<8x8xf32>
    %2 = vector.shape_cast %1 : vector<8x8xf32> to vector<8x8x1xf32>
    %c0_1 = arith.constant 0 : index
    %c0_2 = arith.constant 0 : index
    %3 = vector.load %arg2[%c0_1, %c0_2] : memref<1x512xf32, #tpu.memory_space<vmem>>, vector<1x512xf32>
    %4 = vector.shape_cast %3 : vector<1x512xf32> to vector<1x1x512xf32>
    %5 = vector.broadcast %2 : vector<8x8x1xf32> to vector<8x8x512xf32>
    %6 = vector.broadcast %4 : vector<1x1x512xf32> to vector<8x8x512xf32>
    %7 = arith.mulf %5, %6 : vector<8x8x512xf32>
    %c0_3 = arith.constant 0 : index
    %c0_4 = arith.constant 0 : index
    %8 = vector.load %arg4[%c0_3, %c0_4] : memref<1x512xf32, #tpu.memory_space<vmem>>, vector<1x512xf32>
    %9 = vector.shape_cast %8 : vector<1x512xf32> to vector<1x1x512xf32>
    %10 = vector.broadcast %9 : vector<1x1x512xf32> to vector<8x8x512xf32>
    %11 = arith.addf %7, %10 : vector<8x8x512xf32>
    %c0_5 = arith.constant 0 : index
    %c0_6 = arith.constant 0 : index
    %c0_7 = arith.constant 0 : index
    %12 = vector.load %arg10[%c0_5, %c0_6, %c0_7] : memref<8x8x512xf32, #tpu.memory_space<vmem>>, vector<8x8x512xf32>
    tpu.vector_store %arg10[%c0_5, %c0_6, %c0_7], %11 {strides = array<i32>} : memref<8x8x512xf32, #tpu.memory_space<vmem>>, vector<8x8x512xf32>,
    %c0_8 = arith.constant 0 : index
    %c0_9 = arith.constant 0 : index
    %c0_10 = arith.constant 0 : index
    %13 = vector.load %arg10[%c0_8, %c0_9, %c0_10] : memref<8x8x512xf32, #tpu.memory_space<vmem>>, vector<1x8x512xf32>
    %14 = vector.shape_cast %13 : vector<1x8x512xf32> to vector<8x512xf32>
    %15 = vector.extract_strided_slice %14 {offsets = [0, 0], sizes = [8, 128], strides = [1, 1]} : vector<8x512xf32> to vector<8x128xf32>
    %cst = arith.constant 5.000000e-01 : f32
    %16 = vector.broadcast %cst : f32 to vector<8x128xf32>
    %17 = arith.mulf %16, %15 : vector<8x128xf32>
    %18 = math.tanh %17 : vector<8x128xf32>
    %cst_11 = arith.constant 5.000000e-01 : f32
    %19 = vector.broadcast %cst_11 : f32 to vector<8x128xf32>
    %20 = arith.mulf %19, %18 : vector<8x128xf32>
    %cst_12 = arith.constant 5.000000e-01 : f32
    %21 = vector.broadcast %cst_12 : f32 to vector<8x128xf32>
    %22 = arith.addf %20, %21 : vector<8x128xf32>
    %23 = vector.extract_strided_slice %14 {offsets = [0, 256], sizes = [8, 128], strides = [1, 1]} : vector<8x512xf32> to vector<8x128xf32>
    %24 = math.tanh %23 : vector<8x128xf32>
    %25 = vector.extract_strided_slice %14 {offsets = [0, 384], sizes = [8, 128], strides = [1, 1]} : vector<8x512xf32> to vector<8x128xf32>
    %cst_13 = arith.constant 5.000000e-01 : f32
    %26 = vector.broadcast %cst_13 : f32 to vector<8x128xf32>
    %27 = arith.mulf %26, %25 : vector<8x128xf32>
    %28 = math.tanh %27 : vector<8x128xf32>
    %cst_14 = arith.constant 5.000000e-01 : f32
    %29 = vector.broadcast %cst_14 : f32 to vector<8x128xf32>
    %30 = arith.mulf %29, %28 : vector<8x128xf32>
    %cst_15 = arith.constant 5.000000e-01 : f32
    %31 = vector.broadcast %cst_15 : f32 to vector<8x128xf32>
    %32 = arith.addf %30, %31 : vector<8x128xf32>
    %33 = arith.mulf %22, %24 : vector<8x128xf32>
    %34 = math.tanh %33 : vector<8x128xf32>
    %35 = arith.mulf %32, %34 : vector<8x128xf32>
    %c1 = arith.constant 1 : index
    %c0_16 = arith.constant 0 : index
    %c0_17 = arith.constant 0 : index
    %36 = vector.load %arg10[%c1, %c0_16, %c0_17] : memref<8x8x512xf32, #tpu.memory_space<vmem>>, vector<1x8x512xf32>
    %37 = vector.shape_cast %36 : vector<1x8x512xf32> to vector<8x512xf32>
    %38 = arith.truncf %35 : vector<8x128xf32> to vector<8x128xbf16>
    %c0_18 = arith.constant 0 : index
    %c0_19 = arith.constant 0 : index
    %39 = vector.load %arg3[%c0_18, %c0_19] : memref<128x512xbf16, #tpu.memory_space<vmem>>, vector<128x512xbf16>
    %cst_20 = arith.constant dense<0.000000e+00> : vector<8x512xf32>
    %40 = tpu.matmul %38, %39, %cst_20 {dimension_numbers = #tpu.dot_dimension_numbers<[1], [0], [0], [1], [0, 0, 1, 1], [], []>} : vector<8x128xbf16>, vector<128x512xbf16>, vector<8x512xf32> -> vector<8x512xf32>
    %41 = arith.addf %37, %40 : vector<8x512xf32>
    %42 = vector.extract_strided_slice %41 {offsets = [0, 0], sizes = [8, 128], strides = [1, 1]} : vector<8x512xf32> to vector<8x128xf32>
    %cst_21 = arith.constant 5.000000e-01 : f32
    %43 = vector.broadcast %cst_21 : f32 to vector<8x128xf32>
    %44 = arith.mulf %43, %42 : vector<8x128xf32>
    %45 = math.tanh %44 : vector<8x128xf32>
    %cst_22 = arith.constant 5.000000e-01 : f32
    %46 = vector.broadcast %cst_22 : f32 to vector<8x128xf32>
    %47 = arith.mulf %46, %45 : vector<8x128xf32>
    %cst_23 = arith.constant 5.000000e-01 : f32
    %48 = vector.broadcast %cst_23 : f32 to vector<8x128xf32>
    %49 = arith.addf %47, %48 : vector<8x128xf32>
    %50 = vector.extract_strided_slice %41 {offsets = [0, 256], sizes = [8, 128], strides = [1, 1]} : vector<8x512xf32> to vector<8x128xf32>
    %51 = math.tanh %50 : vector<8x128xf32>
    %52 = vector.extract_strided_slice %41 {offsets = [0, 384], sizes = [8, 128], strides = [1, 1]} : vector<8x512xf32> to vector<8x128xf32>
    %cst_24 = arith.constant 5.000000e-01 : f32
    %53 = vector.broadcast %cst_24 : f32 to vector<8x128xf32>
    %54 = arith.mulf %53, %52 : vector<8x128xf32>
    %55 = math.tanh %54 : vector<8x128xf32>
    %cst_25 = arith.constant 5.000000e-01 : f32
    %56 = vector.broadcast %cst_25 : f32 to vector<8x128xf32>
    %57 = arith.mulf %56, %55 : vector<8x128xf32>
    %cst_26 = arith.constant 5.000000e-01 : f32
    %58 = vector.broadcast %cst_26 : f32 to vector<8x128xf32>
    %59 = arith.addf %57, %58 : vector<8x128xf32>
    %60 = vector.extract_strided_slice %41 {offsets = [0, 128], sizes = [8, 128], strides = [1, 1]} : vector<8x512xf32> to vector<8x128xf32>
    %cst_27 = arith.constant 5.000000e-01 : f32
    %61 = vector.broadcast %cst_27 : f32 to vector<8x128xf32>
    %62 = arith.mulf %61, %60 : vector<8x128xf32>
    %63 = math.tanh %62 : vector<8x128xf32>
    %cst_28 = arith.constant 5.000000e-01 : f32
    %64 = vector.broadcast %cst_28 : f32 to vector<8x128xf32>
    %65 = arith.mulf %64, %63 : vector<8x128xf32>
    %cst_29 = arith.constant 5.000000e-01 : f32
    %66 = vector.broadcast %cst_29 : f32 to vector<8x128xf32>
    %67 = arith.addf %65, %66 : vector<8x128xf32>
    %68 = arith.mulf %67, %33 : vector<8x128xf32>
    %69 = arith.mulf %49, %51 : vector<8x128xf32>
    %70 = arith.addf %68, %69 : vector<8x128xf32>
    %71 = math.tanh %70 : vector<8x128xf32>
    %72 = arith.mulf %59, %71 : vector<8x128xf32>
    %c2 = arith.constant 2 : index
    %c0_30 = arith.constant 0 : index
    %c0_31 = arith.constant 0 : index
    %73 = vector.load %arg10[%c2, %c0_30, %c0_31] : memref<8x8x512xf32, #tpu.memory_space<vmem>>, vector<1x8x512xf32>
    %74 = vector.shape_cast %73 : vector<1x8x512xf32> to vector<8x512xf32>
    %75 = arith.truncf %72 : vector<8x128xf32> to vector<8x128xbf16>
    %c0_32 = arith.constant 0 : index
    %c0_33 = arith.constant 0 : index
    %76 = vector.load %arg3[%c0_32, %c0_33] : memref<128x512xbf16, #tpu.memory_space<vmem>>, vector<128x512xbf16>
    %cst_34 = arith.constant dense<0.000000e+00> : vector<8x512xf32>
    %77 = tpu.matmul %75, %76, %cst_34 {dimension_numbers = #tpu.dot_dimension_numbers<[1], [0], [0], [1], [0, 0, 1, 1], [], []>} : vector<8x128xbf16>, vector<128x512xbf16>, vector<8x512xf32> -> vector<8x512xf32>
    %78 = arith.addf %74, %77 : vector<8x512xf32>
    %79 = vector.extract_strided_slice %78 {offsets = [0, 0], sizes = [8, 128], strides = [1, 1]} : vector<8x512xf32> to vector<8x128xf32>
    %cst_35 = arith.constant 5.000000e-01 : f32
    %80 = vector.broadcast %cst_35 : f32 to vector<8x128xf32>
    %81 = arith.mulf %80, %79 : vector<8x128xf32>
    %82 = math.tanh %81 : vector<8x128xf32>
    %cst_36 = arith.constant 5.000000e-01 : f32
    %83 = vector.broadcast %cst_36 : f32 to vector<8x128xf32>
    %84 = arith.mulf %83, %82 : vector<8x128xf32>
    %cst_37 = arith.constant 5.000000e-01 : f32
    %85 = vector.broadcast %cst_37 : f32 to vector<8x128xf32>
    %86 = arith.addf %84, %85 : vector<8x128xf32>
    %87 = vector.extract_strided_slice %78 {offsets = [0, 256], sizes = [8, 128], strides = [1, 1]} : vector<8x512xf32> to vector<8x128xf32>
    %88 = math.tanh %87 : vector<8x128xf32>
    %89 = vector.extract_strided_slice %78 {offsets = [0, 384], sizes = [8, 128], strides = [1, 1]} : vector<8x512xf32> to vector<8x128xf32>
    %cst_38 = arith.constant 5.000000e-01 : f32
    %90 = vector.broadcast %cst_38 : f32 to vector<8x128xf32>
    %91 = arith.mulf %90, %89 : vector<8x128xf32>
    %92 = math.tanh %91 : vector<8x128xf32>
    %cst_39 = arith.constant 5.000000e-01 : f32
    %93 = vector.broadcast %cst_39 : f32 to vector<8x128xf32>
    %94 = arith.mulf %93, %92 : vector<8x128xf32>
    %cst_40 = arith.constant 5.000000e-01 : f32
    %95 = vector.broadcast %cst_40 : f32 to vector<8x128xf32>
    %96 = arith.addf %94, %95 : vector<8x128xf32>
    %97 = vector.extract_strided_slice %78 {offsets = [0, 128], sizes = [8, 128], strides = [1, 1]} : vector<8x512xf32> to vector<8x128xf32>
    %cst_41 = arith.constant 5.000000e-01 : f32
    %98 = vector.broadcast %cst_41 : f32 to vector<8x128xf32>
    %99 = arith.mulf %98, %97 : vector<8x128xf32>
    %100 = math.tanh %99 : vector<8x128xf32>
    %cst_42 = arith.constant 5.000000e-01 : f32
    %101 = vector.broadcast %cst_42 : f32 to vector<8x128xf32>
    %102 = arith.mulf %101, %100 : vector<8x128xf32>
    %cst_43 = arith.constant 5.000000e-01 : f32
    %103 = vector.broadcast %cst_43 : f32 to vector<8x128xf32>
    %104 = arith.addf %102, %103 : vector<8x128xf32>
    %105 = arith.mulf %104, %70 : vector<8x128xf32>
    %106 = arith.mulf %86, %88 : vector<8x128xf32>
    %107 = arith.addf %105, %106 : vector<8x128xf32>
    %108 = math.tanh %107 : vector<8x128xf32>
    %109 = arith.mulf %96, %108 : vector<8x128xf32>
    %c3 = arith.constant 3 : index
    %c0_44 = arith.constant 0 : index
    %c0_45 = arith.constant 0 : index
    %110 = vector.load %arg10[%c3, %c0_44, %c0_45] : memref<8x8x512xf32, #tpu.memory_space<vmem>>, vector<1x8x512xf32>
    %111 = vector.shape_cast %110 : vector<1x8x512xf32> to vector<8x512xf32>
    %112 = arith.truncf %109 : vector<8x128xf32> to vector<8x128xbf16>
    %c0_46 = arith.constant 0 : index
    %c0_47 = arith.constant 0 : index
    %113 = vector.load %arg3[%c0_46, %c0_47] : memref<128x512xbf16, #tpu.memory_space<vmem>>, vector<128x512xbf16>
    %cst_48 = arith.constant dense<0.000000e+00> : vector<8x512xf32>
    %114 = tpu.matmul %112, %113, %cst_48 {dimension_numbers = #tpu.dot_dimension_numbers<[1], [0], [0], [1], [0, 0, 1, 1], [], []>} : vector<8x128xbf16>, vector<128x512xbf16>, vector<8x512xf32> -> vector<8x512xf32>
    %115 = arith.addf %111, %114 : vector<8x512xf32>
    %116 = vector.extract_strided_slice %115 {offsets = [0, 0], sizes = [8, 128], strides = [1, 1]} : vector<8x512xf32> to vector<8x128xf32>
    %cst_49 = arith.constant 5.000000e-01 : f32
    %117 = vector.broadcast %cst_49 : f32 to vector<8x128xf32>
    %118 = arith.mulf %117, %116 : vector<8x128xf32>
    %119 = math.tanh %118 : vector<8x128xf32>
    %cst_50 = arith.constant 5.000000e-01 : f32
    %120 = vector.broadcast %cst_50 : f32 to vector<8x128xf32>
    %121 = arith.mulf %120, %119 : vector<8x128xf32>
    %cst_51 = arith.constant 5.000000e-01 : f32
    %122 = vector.broadcast %cst_51 : f32 to vector<8x128xf32>
    %123 = arith.addf %121, %122 : vector<8x128xf32>
    %124 = vector.extract_strided_slice %115 {offsets = [0, 256], sizes = [8, 128], strides = [1, 1]} : vector<8x512xf32> to vector<8x128xf32>
    %125 = math.tanh %124 : vector<8x128xf32>
    %126 = vector.extract_strided_slice %115 {offsets = [0, 384], sizes = [8, 128], strides = [1, 1]} : vector<8x512xf32> to vector<8x128xf32>
    %cst_52 = arith.constant 5.000000e-01 : f32
    %127 = vector.broadcast %cst_52 : f32 to vector<8x128xf32>
    %128 = arith.mulf %127, %126 : vector<8x128xf32>
    %129 = math.tanh %128 : vector<8x128xf32>
    %cst_53 = arith.constant 5.000000e-01 : f32
    %130 = vector.broadcast %cst_53 : f32 to vector<8x128xf32>
    %131 = arith.mulf %130, %129 : vector<8x128xf32>
    %cst_54 = arith.constant 5.000000e-01 : f32
    %132 = vector.broadcast %cst_54 : f32 to vector<8x128xf32>
    %133 = arith.addf %131, %132 : vector<8x128xf32>
    %134 = vector.extract_strided_slice %115 {offsets = [0, 128], sizes = [8, 128], strides = [1, 1]} : vector<8x512xf32> to vector<8x128xf32>
    %cst_55 = arith.constant 5.000000e-01 : f32
    %135 = vector.broadcast %cst_55 : f32 to vector<8x128xf32>
    %136 = arith.mulf %135, %134 : vector<8x128xf32>
    %137 = math.tanh %136 : vector<8x128xf32>
    %cst_56 = arith.constant 5.000000e-01 : f32
    %138 = vector.broadcast %cst_56 : f32 to vector<8x128xf32>
    %139 = arith.mulf %138, %137 : vector<8x128xf32>
    %cst_57 = arith.constant 5.000000e-01 : f32
    %140 = vector.broadcast %cst_57 : f32 to vector<8x128xf32>
    %141 = arith.addf %139, %140 : vector<8x128xf32>
    %142 = arith.mulf %141, %107 : vector<8x128xf32>
    %143 = arith.mulf %123, %125 : vector<8x128xf32>
    %144 = arith.addf %142, %143 : vector<8x128xf32>
    %145 = math.tanh %144 : vector<8x128xf32>
    %146 = arith.mulf %133, %145 : vector<8x128xf32>
    %c4 = arith.constant 4 : index
    %c0_58 = arith.constant 0 : index
    %c0_59 = arith.constant 0 : index
    %147 = vector.load %arg10[%c4, %c0_58, %c0_59] : memref<8x8x512xf32, #tpu.memory_space<vmem>>, vector<1x8x512xf32>
    %148 = vector.shape_cast %147 : vector<1x8x512xf32> to vector<8x512xf32>
    %149 = arith.truncf %146 : vector<8x128xf32> to vector<8x128xbf16>
    %c0_60 = arith.constant 0 : index
    %c0_61 = arith.constant 0 : index
    %150 = vector.load %arg3[%c0_60, %c0_61] : memref<128x512xbf16, #tpu.memory_space<vmem>>, vector<128x512xbf16>
    %cst_62 = arith.constant dense<0.000000e+00> : vector<8x512xf32>
    %151 = tpu.matmul %149, %150, %cst_62 {dimension_numbers = #tpu.dot_dimension_numbers<[1], [0], [0], [1], [0, 0, 1, 1], [], []>} : vector<8x128xbf16>, vector<128x512xbf16>, vector<8x512xf32> -> vector<8x512xf32>
    %152 = arith.addf %148, %151 : vector<8x512xf32>
    %153 = vector.extract_strided_slice %152 {offsets = [0, 0], sizes = [8, 128], strides = [1, 1]} : vector<8x512xf32> to vector<8x128xf32>
    %cst_63 = arith.constant 5.000000e-01 : f32
    %154 = vector.broadcast %cst_63 : f32 to vector<8x128xf32>
    %155 = arith.mulf %154, %153 : vector<8x128xf32>
    %156 = math.tanh %155 : vector<8x128xf32>
    %cst_64 = arith.constant 5.000000e-01 : f32
    %157 = vector.broadcast %cst_64 : f32 to vector<8x128xf32>
    %158 = arith.mulf %157, %156 : vector<8x128xf32>
    %cst_65 = arith.constant 5.000000e-01 : f32
    %159 = vector.broadcast %cst_65 : f32 to vector<8x128xf32>
    %160 = arith.addf %158, %159 : vector<8x128xf32>
    %161 = vector.extract_strided_slice %152 {offsets = [0, 256], sizes = [8, 128], strides = [1, 1]} : vector<8x512xf32> to vector<8x128xf32>
    %162 = math.tanh %161 : vector<8x128xf32>
    %163 = vector.extract_strided_slice %152 {offsets = [0, 384], sizes = [8, 128], strides = [1, 1]} : vector<8x512xf32> to vector<8x128xf32>
    %cst_66 = arith.constant 5.000000e-01 : f32
    %164 = vector.broadcast %cst_66 : f32 to vector<8x128xf32>
    %165 = arith.mulf %164, %163 : vector<8x128xf32>
    %166 = math.tanh %165 : vector<8x128xf32>
    %cst_67 = arith.constant 5.000000e-01 : f32
    %167 = vector.broadcast %cst_67 : f32 to vector<8x128xf32>
    %168 = arith.mulf %167, %166 : vector<8x128xf32>
    %cst_68 = arith.constant 5.000000e-01 : f32
    %169 = vector.broadcast %cst_68 : f32 to vector<8x128xf32>
    %170 = arith.addf %168, %169 : vector<8x128xf32>
    %171 = vector.extract_strided_slice %152 {offsets = [0, 128], sizes = [8, 128], strides = [1, 1]} : vector<8x512xf32> to vector<8x128xf32>
    %cst_69 = arith.constant 5.000000e-01 : f32
    %172 = vector.broadcast %cst_69 : f32 to vector<8x128xf32>
    %173 = arith.mulf %172, %171 : vector<8x128xf32>
    %174 = math.tanh %173 : vector<8x128xf32>
    %cst_70 = arith.constant 5.000000e-01 : f32
    %175 = vector.broadcast %cst_70 : f32 to vector<8x128xf32>
    %176 = arith.mulf %175, %174 : vector<8x128xf32>
    %cst_71 = arith.constant 5.000000e-01 : f32
    %177 = vector.broadcast %cst_71 : f32 to vector<8x128xf32>
    %178 = arith.addf %176, %177 : vector<8x128xf32>
    %179 = arith.mulf %178, %144 : vector<8x128xf32>
    %180 = arith.mulf %160, %162 : vector<8x128xf32>
    %181 = arith.addf %179, %180 : vector<8x128xf32>
    %182 = math.tanh %181 : vector<8x128xf32>
    %183 = arith.mulf %170, %182 : vector<8x128xf32>
    %c5 = arith.constant 5 : index
    %c0_72 = arith.constant 0 : index
    %c0_73 = arith.constant 0 : index
    %184 = vector.load %arg10[%c5, %c0_72, %c0_73] : memref<8x8x512xf32, #tpu.memory_space<vmem>>, vector<1x8x512xf32>
    %185 = vector.shape_cast %184 : vector<1x8x512xf32> to vector<8x512xf32>
    %186 = arith.truncf %183 : vector<8x128xf32> to vector<8x128xbf16>
    %c0_74 = arith.constant 0 : index
    %c0_75 = arith.constant 0 : index
    %187 = vector.load %arg3[%c0_74, %c0_75] : memref<128x512xbf16, #tpu.memory_space<vmem>>, vector<128x512xbf16>
    %cst_76 = arith.constant dense<0.000000e+00> : vector<8x512xf32>
    %188 = tpu.matmul %186, %187, %cst_76 {dimension_numbers = #tpu.dot_dimension_numbers<[1], [0], [0], [1], [0, 0, 1, 1], [], []>} : vector<8x128xbf16>, vector<128x512xbf16>, vector<8x512xf32> -> vector<8x512xf32>
    %189 = arith.addf %185, %188 : vector<8x512xf32>
    %190 = vector.extract_strided_slice %189 {offsets = [0, 0], sizes = [8, 128], strides = [1, 1]} : vector<8x512xf32> to vector<8x128xf32>
    %cst_77 = arith.constant 5.000000e-01 : f32
    %191 = vector.broadcast %cst_77 : f32 to vector<8x128xf32>
    %192 = arith.mulf %191, %190 : vector<8x128xf32>
    %193 = math.tanh %192 : vector<8x128xf32>
    %cst_78 = arith.constant 5.000000e-01 : f32
    %194 = vector.broadcast %cst_78 : f32 to vector<8x128xf32>
    %195 = arith.mulf %194, %193 : vector<8x128xf32>
    %cst_79 = arith.constant 5.000000e-01 : f32
    %196 = vector.broadcast %cst_79 : f32 to vector<8x128xf32>
    %197 = arith.addf %195, %196 : vector<8x128xf32>
    %198 = vector.extract_strided_slice %189 {offsets = [0, 256], sizes = [8, 128], strides = [1, 1]} : vector<8x512xf32> to vector<8x128xf32>
    %199 = math.tanh %198 : vector<8x128xf32>
    %200 = vector.extract_strided_slice %189 {offsets = [0, 384], sizes = [8, 128], strides = [1, 1]} : vector<8x512xf32> to vector<8x128xf32>
    %cst_80 = arith.constant 5.000000e-01 : f32
    %201 = vector.broadcast %cst_80 : f32 to vector<8x128xf32>
    %202 = arith.mulf %201, %200 : vector<8x128xf32>
    %203 = math.tanh %202 : vector<8x128xf32>
    %cst_81 = arith.constant 5.000000e-01 : f32
    %204 = vector.broadcast %cst_81 : f32 to vector<8x128xf32>
    %205 = arith.mulf %204, %203 : vector<8x128xf32>
    %cst_82 = arith.constant 5.000000e-01 : f32
    %206 = vector.broadcast %cst_82 : f32 to vector<8x128xf32>
    %207 = arith.addf %205, %206 : vector<8x128xf32>
    %208 = vector.extract_strided_slice %189 {offsets = [0, 128], sizes = [8, 128], strides = [1, 1]} : vector<8x512xf32> to vector<8x128xf32>
    %cst_83 = arith.constant 5.000000e-01 : f32
    %209 = vector.broadcast %cst_83 : f32 to vector<8x128xf32>
    %210 = arith.mulf %209, %208 : vector<8x128xf32>
    %211 = math.tanh %210 : vector<8x128xf32>
    %cst_84 = arith.constant 5.000000e-01 : f32
    %212 = vector.broadcast %cst_84 : f32 to vector<8x128xf32>
    %213 = arith.mulf %212, %211 : vector<8x128xf32>
    %cst_85 = arith.constant 5.000000e-01 : f32
    %214 = vector.broadcast %cst_85 : f32 to vector<8x128xf32>
    %215 = arith.addf %213, %214 : vector<8x128xf32>
    %216 = arith.mulf %215, %181 : vector<8x128xf32>
    %217 = arith.mulf %197, %199 : vector<8x128xf32>
    %218 = arith.addf %216, %217 : vector<8x128xf32>
    %219 = math.tanh %218 : vector<8x128xf32>
    %220 = arith.mulf %207, %219 : vector<8x128xf32>
    %c6 = arith.constant 6 : index
    %c0_86 = arith.constant 0 : index
    %c0_87 = arith.constant 0 : index
    %221 = vector.load %arg10[%c6, %c0_86, %c0_87] : memref<8x8x512xf32, #tpu.memory_space<vmem>>, vector<1x8x512xf32>
    %222 = vector.shape_cast %221 : vector<1x8x512xf32> to vector<8x512xf32>
    %223 = arith.truncf %220 : vector<8x128xf32> to vector<8x128xbf16>
    %c0_88 = arith.constant 0 : index
    %c0_89 = arith.constant 0 : index
    %224 = vector.load %arg3[%c0_88, %c0_89] : memref<128x512xbf16, #tpu.memory_space<vmem>>, vector<128x512xbf16>
    %cst_90 = arith.constant dense<0.000000e+00> : vector<8x512xf32>
    %225 = tpu.matmul %223, %224, %cst_90 {dimension_numbers = #tpu.dot_dimension_numbers<[1], [0], [0], [1], [0, 0, 1, 1], [], []>} : vector<8x128xbf16>, vector<128x512xbf16>, vector<8x512xf32> -> vector<8x512xf32>
    %226 = arith.addf %222, %225 : vector<8x512xf32>
    %227 = vector.extract_strided_slice %226 {offsets = [0, 0], sizes = [8, 128], strides = [1, 1]} : vector<8x512xf32> to vector<8x128xf32>
    %cst_91 = arith.constant 5.000000e-01 : f32
    %228 = vector.broadcast %cst_91 : f32 to vector<8x128xf32>
    %229 = arith.mulf %228, %227 : vector<8x128xf32>
    %230 = math.tanh %229 : vector<8x128xf32>
    %cst_92 = arith.constant 5.000000e-01 : f32
    %231 = vector.broadcast %cst_92 : f32 to vector<8x128xf32>
    %232 = arith.mulf %231, %230 : vector<8x128xf32>
    %cst_93 = arith.constant 5.000000e-01 : f32
    %233 = vector.broadcast %cst_93 : f32 to vector<8x128xf32>
    %234 = arith.addf %232, %233 : vector<8x128xf32>
    %235 = vector.extract_strided_slice %226 {offsets = [0, 256], sizes = [8, 128], strides = [1, 1]} : vector<8x512xf32> to vector<8x128xf32>
    %236 = math.tanh %235 : vector<8x128xf32>
    %237 = vector.extract_strided_slice %226 {offsets = [0, 384], sizes = [8, 128], strides = [1, 1]} : vector<8x512xf32> to vector<8x128xf32>
    %cst_94 = arith.constant 5.000000e-01 : f32
    %238 = vector.broadcast %cst_94 : f32 to vector<8x128xf32>
    %239 = arith.mulf %238, %237 : vector<8x128xf32>
    %240 = math.tanh %239 : vector<8x128xf32>
    %cst_95 = arith.constant 5.000000e-01 : f32
    %241 = vector.broadcast %cst_95 : f32 to vector<8x128xf32>
    %242 = arith.mulf %241, %240 : vector<8x128xf32>
    %cst_96 = arith.constant 5.000000e-01 : f32
    %243 = vector.broadcast %cst_96 : f32 to vector<8x128xf32>
    %244 = arith.addf %242, %243 : vector<8x128xf32>
    %245 = vector.extract_strided_slice %226 {offsets = [0, 128], sizes = [8, 128], strides = [1, 1]} : vector<8x512xf32> to vector<8x128xf32>
    %cst_97 = arith.constant 5.000000e-01 : f32
    %246 = vector.broadcast %cst_97 : f32 to vector<8x128xf32>
    %247 = arith.mulf %246, %245 : vector<8x128xf32>
    %248 = math.tanh %247 : vector<8x128xf32>
    %cst_98 = arith.constant 5.000000e-01 : f32
    %249 = vector.broadcast %cst_98 : f32 to vector<8x128xf32>
    %250 = arith.mulf %249, %248 : vector<8x128xf32>
    %cst_99 = arith.constant 5.000000e-01 : f32
    %251 = vector.broadcast %cst_99 : f32 to vector<8x128xf32>
    %252 = arith.addf %250, %251 : vector<8x128xf32>
    %253 = arith.mulf %252, %218 : vector<8x128xf32>
    %254 = arith.mulf %234, %236 : vector<8x128xf32>
    %255 = arith.addf %253, %254 : vector<8x128xf32>
    %256 = math.tanh %255 : vector<8x128xf32>
    %257 = arith.mulf %244, %256 : vector<8x128xf32>
    %c7 = arith.constant 7 : index
    %c0_100 = arith.constant 0 : index
    %c0_101 = arith.constant 0 : index
    %258 = vector.load %arg10[%c7, %c0_100, %c0_101] : memref<8x8x512xf32, #tpu.memory_space<vmem>>, vector<1x8x512xf32>
    %259 = vector.shape_cast %258 : vector<1x8x512xf32> to vector<8x512xf32>
    %260 = arith.truncf %257 : vector<8x128xf32> to vector<8x128xbf16>
    %c0_102 = arith.constant 0 : index
    %c0_103 = arith.constant 0 : index
    %261 = vector.load %arg3[%c0_102, %c0_103] : memref<128x512xbf16, #tpu.memory_space<vmem>>, vector<128x512xbf16>
    %cst_104 = arith.constant dense<0.000000e+00> : vector<8x512xf32>
    %262 = tpu.matmul %260, %261, %cst_104 {dimension_numbers = #tpu.dot_dimension_numbers<[1], [0], [0], [1], [0, 0, 1, 1], [], []>} : vector<8x128xbf16>, vector<128x512xbf16>, vector<8x512xf32> -> vector<8x512xf32>
    %263 = arith.addf %259, %262 : vector<8x512xf32>
    %264 = vector.extract_strided_slice %263 {offsets = [0, 0], sizes = [8, 128], strides = [1, 1]} : vector<8x512xf32> to vector<8x128xf32>
    %cst_105 = arith.constant 5.000000e-01 : f32
    %265 = vector.broadcast %cst_105 : f32 to vector<8x128xf32>
    %266 = arith.mulf %265, %264 : vector<8x128xf32>
    %267 = math.tanh %266 : vector<8x128xf32>
    %cst_106 = arith.constant 5.000000e-01 : f32
    %268 = vector.broadcast %cst_106 : f32 to vector<8x128xf32>
    %269 = arith.mulf %268, %267 : vector<8x128xf32>
    %cst_107 = arith.constant 5.000000e-01 : f32
    %270 = vector.broadcast %cst_107 : f32 to vector<8x128xf32>
    %271 = arith.addf %269, %270 : vector<8x128xf32>
    %272 = vector.extract_strided_slice %263 {offsets = [0, 256], sizes = [8, 128], strides = [1, 1]} : vector<8x512xf32> to vector<8x128xf32>
    %273 = math.tanh %272 : vector<8x128xf32>
    %274 = vector.extract_strided_slice %263 {offsets = [0, 384], sizes = [8, 128], strides = [1, 1]} : vector<8x512xf32> to vector<8x128xf32>
    %cst_108 = arith.constant 5.000000e-01 : f32
    %275 = vector.broadcast %cst_108 : f32 to vector<8x128xf32>
    %276 = arith.mulf %275, %274 : vector<8x128xf32>
    %277 = math.tanh %276 : vector<8x128xf32>
    %cst_109 = arith.constant 5.000000e-01 : f32
    %278 = vector.broadcast %cst_109 : f32 to vector<8x128xf32>
    %279 = arith.mulf %278, %277 : vector<8x128xf32>
    %cst_110 = arith.constant 5.000000e-01 : f32
    %280 = vector.broadcast %cst_110 : f32 to vector<8x128xf32>
    %281 = arith.addf %279, %280 : vector<8x128xf32>
    %282 = vector.extract_strided_slice %263 {offsets = [0, 128], sizes = [8, 128], strides = [1, 1]} : vector<8x512xf32> to vector<8x128xf32>
    %cst_111 = arith.constant 5.000000e-01 : f32
    %283 = vector.broadcast %cst_111 : f32 to vector<8x128xf32>
    %284 = arith.mulf %283, %282 : vector<8x128xf32>
    %285 = math.tanh %284 : vector<8x128xf32>
    %cst_112 = arith.constant 5.000000e-01 : f32
    %286 = vector.broadcast %cst_112 : f32 to vector<8x128xf32>
    %287 = arith.mulf %286, %285 : vector<8x128xf32>
    %cst_113 = arith.constant 5.000000e-01 : f32
    %288 = vector.broadcast %cst_113 : f32 to vector<8x128xf32>
    %289 = arith.addf %287, %288 : vector<8x128xf32>
    %290 = arith.mulf %289, %255 : vector<8x128xf32>
    %291 = arith.mulf %271, %273 : vector<8x128xf32>
    %292 = arith.addf %290, %291 : vector<8x128xf32>
    %293 = math.tanh %292 : vector<8x128xf32>
    %294 = arith.mulf %281, %293 : vector<8x128xf32>
    %295 = arith.truncf %294 : vector<8x128xf32> to vector<8x128xbf16>
    %c0_114 = arith.constant 0 : index
    %c0_115 = arith.constant 0 : index
    %296 = vector.load %arg5[%c0_114, %c0_115] : memref<128x128xbf16, #tpu.memory_space<vmem>>, vector<128x128xbf16>
    %cst_116 = arith.constant dense<0.000000e+00> : vector<8x128xf32>
    %297 = tpu.matmul %295, %296, %cst_116 {dimension_numbers = #tpu.dot_dimension_numbers<[1], [0], [0], [1], [0, 0, 1, 1], [], []>} : vector<8x128xbf16>, vector<128x128xbf16>, vector<8x128xf32> -> vector<8x128xf32>
    %c0_117 = arith.constant 0 : index
    %c0_118 = arith.constant 0 : index
    %298 = vector.load %arg6[%c0_117, %c0_118] : memref<1x128xf32, #tpu.memory_space<vmem>>, vector<1x128xf32>
    %299 = vector.broadcast %298 : vector<1x128xf32> to vector<8x128xf32>
    %300 = arith.addf %297, %299 : vector<8x128xf32>
    %cst_119 = arith.constant dense<0xFF800000> : vector<8xf32>
    %301 = vector.multi_reduction <maximumf>, %300, %cst_119 [1] : vector<8x128xf32> to vector<8xf32>
    %302 = vector.shape_cast %301 : vector<8xf32> to vector<8x1xf32>
    %303 = vector.broadcast %302 : vector<8x1xf32> to vector<8x128xf32>
    %304 = arith.subf %300, %303 : vector<8x128xf32>
    %305 = math.exp %304 : vector<8x128xf32>
    %cst_120 = arith.constant dense<0.000000e+00> : vector<8xf32>
    %306 = vector.multi_reduction <add>, %305, %cst_120 [1] : vector<8x128xf32> to vector<8xf32>
    %307 = vector.shape_cast %306 : vector<8xf32> to vector<8x1xf32>
    %308 = tpu.reciprocal %307 : vector<8x1xf32> -> vector<8x1xf32>
    %309 = vector.broadcast %308 : vector<8x1xf32> to vector<8x128xf32>
    %310 = arith.mulf %305, %309 : vector<8x128xf32>
    %c0_121 = arith.constant 0 : index
    %c0_122 = arith.constant 0 : index
    %311 = vector.load %arg7[%c0_121, %c0_122] : memref<8x128xf32, #tpu.memory_space<vmem>>, vector<8x128xf32>
    tpu.vector_store %arg7[%c0_121, %c0_122], %310 {strides = array<i32>} : memref<8x128xf32, #tpu.memory_space<vmem>>, vector<8x128xf32>,
    %c0_123 = arith.constant 0 : index
    %c0_124 = arith.constant 0 : index
    %312 = vector.load %arg8[%c0_123, %c0_124] : memref<8x128xf32, #tpu.memory_space<vmem>>, vector<8x128xf32>
    tpu.vector_store %arg8[%c0_123, %c0_124], %294 {strides = array<i32>} : memref<8x128xf32, #tpu.memory_space<vmem>>, vector<8x128xf32>,
    %c0_125 = arith.constant 0 : index
    %c0_126 = arith.constant 0 : index
    %313 = vector.load %arg9[%c0_125, %c0_126] : memref<8x128xf32, #tpu.memory_space<vmem>>, vector<8x128xf32>
    tpu.vector_store %arg9[%c0_125, %c0_126], %292 {strides = array<i32>} : memref<8x128xf32, #tpu.memory_space<vmem>>, vector<8x128xf32>,
    return
  }
  func.func @transform_0(%arg0: i32) -> (i32, i32) {
    %c0_i32 = arith.constant 0 : i32
    %c0_i32_0 = arith.constant 0 : i32
    return %arg0, %c0_i32 : i32, i32
  }
  func.func @transform_1(%arg0: i32) -> (i32, i32) {
    %c0_i32 = arith.constant 0 : i32
    %c0_i32_0 = arith.constant 0 : i32
    %c0_i32_1 = arith.constant 0 : i32
    return %c0_i32, %c0_i32_0 : i32, i32
  }
  func.func @transform_2(%arg0: i32) -> (i32, i32) {
    %c0_i32 = arith.constant 0 : i32
    %c0_i32_0 = arith.constant 0 : i32
    %c0_i32_1 = arith.constant 0 : i32
    return %c0_i32, %c0_i32_0 : i32, i32
  }
  func.func @transform_3(%arg0: i32) -> (i32, i32) {
    %c0_i32 = arith.constant 0 : i32
    %c0_i32_0 = arith.constant 0 : i32
    %c0_i32_1 = arith.constant 0 : i32
    return %c0_i32, %c0_i32_0 : i32, i32
  }
  func.func @transform_4(%arg0: i32) -> (i32, i32) {
    %c0_i32 = arith.constant 0 : i32
    %c0_i32_0 = arith.constant 0 : i32
    %c0_i32_1 = arith.constant 0 : i32
    return %c0_i32, %c0_i32_0 : i32, i32
  }
  func.func @transform_5(%arg0: i32) -> (i32, i32) {
    %c0_i32 = arith.constant 0 : i32
    %c0_i32_0 = arith.constant 0 : i32
    %c0_i32_1 = arith.constant 0 : i32
    return %c0_i32, %c0_i32_0 : i32, i32
  }
  func.func @transform_6(%arg0: i32) -> (i32, i32) {
    %c0_i32 = arith.constant 0 : i32
    %c0_i32_0 = arith.constant 0 : i32
    return %arg0, %c0_i32 : i32, i32
  }
  func.func @transform_7(%arg0: i32) -> (i32, i32) {
    %c0_i32 = arith.constant 0 : i32
    %c0_i32_0 = arith.constant 0 : i32
    return %arg0, %c0_i32 : i32, i32
  }
  func.func @transform_8(%arg0: i32) -> (i32, i32) {
    %c0_i32 = arith.constant 0 : i32
    %c0_i32_0 = arith.constant 0 : i32
    return %arg0, %c0_i32 : i32, i32
  }
}

</mosaic_0001>

<llo_original>
// kernel: tpu_custom_call.1
$region0: #{tpu_custom_call.1}
  #allocation0 [shape = 'u32[]', space=smem, size = 0x4, offset = 0x4, fixed_abs, tag = 'smem constant byte address 0x4 - core index']
  #allocation1 [shape = 'u32[144,128]{1,0:T(1,128)}', space=vmem, size = 0x12000, scoped, tag = 'internal scratch']
  #allocation2 [shape = 'f32[8,8,512]{2,1,0:T(8,128)}', space=vmem, size = 0x20000, scoped, tag = 'scratch operand']
  %s0 = inlined_call_operand.hbm [shape: f32[8,8], index: 0, kind: input, shape index: {}]
  %s1 = inlined_call_operand.hbm [shape: f32[1,512], index: 1, kind: input, shape index: {}]
  %s2 = inlined_call_operand.hbm [shape: bf16[128,512], index: 2, kind: input, shape index: {}]
  %s3 = inlined_call_operand.vmem [shape: f32[1,512], index: 3, kind: input, shape index: {}]
  %s4 = inlined_call_operand.hbm [shape: bf16[128,128], index: 4, kind: input, shape index: {}]
  %s5 = inlined_call_operand.vmem [shape: f32[1,128], index: 5, kind: input, shape index: {}]
  %s6 = inlined_call_operand.hbm [shape: f32[8,128], index: 6, kind: output, shape index: {0}]
  %s7 = inlined_call_operand.hbm [shape: f32[8,128], index: 7, kind: output, shape index: {1}]
  %s8 = inlined_call_operand.hbm [shape: f32[8,128], index: 8, kind: output, shape index: {2}]
  %9 = xla_tuple %s6, %s7, %s8
  %s10 = sld [smem:[#allocation0]]
  $region66: #{tpu_custom_call.1} parent=0
    _
  %s12 = ssub.s32 1, %s10
  %s13 = scalar_select 0, %s12, %s10
  $region1: #{tpu_custom_call.1} parent=0
    #allocation3 [shape = 'u8[4096]{0}', space=vmem, size = 0x1000, scoped, tag = 'input window, operand 0, single buffered']
    #allocation4 [shape = 's32[1]{0}', space=sflag, size = 0x4, scoped, tag = 'scoped memory for tpu_custom_call.1']
    #allocation5 [shape = 's32[1]{0}', space=sflag, size = 0x4, scoped, tag = 'scoped memory for tpu_custom_call.1']
    #allocation6 [shape = 'u8[2048]{0}', space=vmem, size = 0x800, scoped, tag = 'input window, operand 1, single buffered']
    #allocation7 [shape = 's32[1]{0}', space=sflag, size = 0x4, scoped, tag = 'scoped memory for tpu_custom_call.1']
    #allocation8 [shape = 'u8[131072]{0}', space=vmem, size = 0x20000, scoped, tag = 'input window, operand 2, single buffered']
    #allocation9 [shape = 'u8[32768]{0}', space=vmem, size = 0x8000, scoped, tag = 'input window, operand 4, single buffered']
    #allocation10 [shape = 's32[1]{0}', space=sflag, size = 0x4, scoped, tag = 'scoped memory for tpu_custom_call.1']
    #allocation11 [shape = 'u8[4096]{0}', space=vmem, size = 0x1000, scoped, tag = 'output window, operand 0, single buffered']
    #allocation12 [shape = 'u8[4096]{0}', space=vmem, size = 0x1000, scoped, tag = 'output window, operand 1, single buffered']
    #allocation13 [shape = 's32[1]{0}', space=sflag, size = 0x4, scoped, tag = 'scoped memory for tpu_custom_call.1']
    #allocation14 [shape = 'u8[4096]{0}', space=vmem, size = 0x1000, scoped, tag = 'output window, operand 2, single buffered']
    %14 = vsyncpa [#allocation4], 0
    %15 = vsyncpa [#allocation7], 0
    %16 = vsyncpa [#allocation10], 0
    %17 = vsyncpa [#allocation5], 0
    %18 = vsyncpa [#allocation13], 0
    // Predicated region
    $region2: #{tpu_custom_call.1} parent=1 // pred_check
      _
    $region3: #{tpu_custom_call.1} parent=1 // pred_check_branch
      %20 = sbr.rel (0) target = $region5
    $region4: #{tpu_custom_call.1} parent=1 // pred_region
      %s22 = ssub.s32 128, 128
      %23 = vsyncadd [#allocation4], %s22
      %s25 = sshll.u32 [#allocation3], 4
      %s26 = int_to_ptr.vmem [resolvable:$true] %s25
      %28 = dma.hbm_to_vmem [thread:$0]  %s0, 128, %s26, [#allocation4]
    $region5: #{tpu_custom_call.1} parent=1 // pred_fallthru
      _
    // Predicated region
    $region6: #{tpu_custom_call.1} parent=1 // pred_check
      _
    $region7: #{tpu_custom_call.1} parent=1 // pred_check_branch
      %30 = sbr.rel (0) target = $region9
    $region8: #{tpu_custom_call.1} parent=1 // pred_region
      %s32 = ssub.s32 64, 64
      %33 = vsyncadd [#allocation7], %s32
      %s35 = sshll.u32 [#allocation6], 4
      %s36 = int_to_ptr.vmem [resolvable:$true] %s35
      %38 = dma.hbm_to_vmem [thread:$0]  %s1, 64, %s36, [#allocation7]
    $region9: #{tpu_custom_call.1} parent=1 // pred_fallthru
      _
    // Predicated region
    $region10: #{tpu_custom_call.1} parent=1 // pred_check
      _
    $region11: #{tpu_custom_call.1} parent=1 // pred_check_branch
      %40 = sbr.rel (0) target = $region13
    $region12: #{tpu_custom_call.1} parent=1 // pred_region
      %s42 = ssub.s32 4096, 4096
      %43 = vsyncadd [#allocation7], %s42
      %s44 = sshll.u32 [#allocation8], 4
      %s45 = int_to_ptr.vmem [resolvable:$true] %s44
      %50 = dma.hbm_to_vmem [thread:$0]  %s2, 4096, %s45, [#allocation7], 256, 256, 16
    $region13: #{tpu_custom_call.1} parent=1 // pred_fallthru
      _
    // Predicated region
    $region14: #{tpu_custom_call.1} parent=1 // pred_check
      _
    $region15: #{tpu_custom_call.1} parent=1 // pred_check_branch
      %52 = sbr.rel (0) target = $region17
    $region16: #{tpu_custom_call.1} parent=1 // pred_region
      _
    $region17: #{tpu_custom_call.1} parent=1 // pred_fallthru
      _
    // Predicated region
    $region18: #{tpu_custom_call.1} parent=1 // pred_check
      _
    $region19: #{tpu_custom_call.1} parent=1 // pred_check_branch
      %54 = sbr.rel (0) target = $region21
    $region20: #{tpu_custom_call.1} parent=1 // pred_region
      %s56 = ssub.s32 1024, 1024
      %57 = vsyncadd [#allocation10], %s56
      %s58 = sshll.u32 [#allocation9], 4
      %s59 = int_to_ptr.vmem [resolvable:$true] %s58
      %64 = dma.hbm_to_vmem [thread:$0]  %s4, 1024, %s59, [#allocation10], 64, 64, 4
    $region21: #{tpu_custom_call.1} parent=1 // pred_fallthru
      _
    // Predicated region
    $region22: #{tpu_custom_call.1} parent=1 // pred_check
      _
    $region23: #{tpu_custom_call.1} parent=1 // pred_check_branch
      %66 = sbr.rel (0) target = $region25
    $region24: #{tpu_custom_call.1} parent=1 // pred_region
      _
    $region25: #{tpu_custom_call.1} parent=1 // pred_fallthru
      _
    // Predicated region
    $region26: #{tpu_custom_call.1} parent=1 // pred_check
      _
    $region27: #{tpu_custom_call.1} parent=1 // pred_check_branch
      %68 = sbr.rel (0) target = $region29
    $region28: #{tpu_custom_call.1} parent=1 // pred_region
      %69 = dma.done [#allocation4], 128
    $region29: #{tpu_custom_call.1} parent=1 // pred_fallthru
      _
    // Predicated region
    $region30: #{tpu_custom_call.1} parent=1 // pred_check
      _
    $region31: #{tpu_custom_call.1} parent=1 // pred_check_branch
      %71 = sbr.rel (0) target = $region33
    $region32: #{tpu_custom_call.1} parent=1 // pred_region
      %72 = dma.done [#allocation7], 64
    $region33: #{tpu_custom_call.1} parent=1 // pred_fallthru
      _
    // Predicated region
    $region34: #{tpu_custom_call.1} parent=1 // pred_check
      _
    $region35: #{tpu_custom_call.1} parent=1 // pred_check_branch
      %74 = sbr.rel (0) target = $region37
    $region36: #{tpu_custom_call.1} parent=1 // pred_region
      %75 = dma.done [#allocation7], 4096
    $region37: #{tpu_custom_call.1} parent=1 // pred_fallthru
      _
    // Predicated region
    $region38: #{tpu_custom_call.1} parent=1 // pred_check
      _
    $region39: #{tpu_custom_call.1} parent=1 // pred_check_branch
      %77 = sbr.rel (0) target = $region41
    $region40: #{tpu_custom_call.1} parent=1 // pred_region
      %78 = dma.done [#allocation10], 1024
    $region41: #{tpu_custom_call.1} parent=1 // pred_fallthru
      _
    %v80 = vld [vmem:[#allocation3] sm:$0xff]
    %81 = vxpose.xlu0.b32.start [1/16] %v80, 128
    %82 = vxpose.xlu0.b32.cont [2/16] 0.0, 128
    %83 = vxpose.xlu0.b32.cont [3/16] 0.0, 128
    %84 = vxpose.xlu0.b32.cont [4/16] 0.0, 128
    %85 = vxpose.xlu0.b32.cont [5/16] 0.0, 128
    %86 = vxpose.xlu0.b32.cont [6/16] 0.0, 128
    %87 = vxpose.xlu0.b32.cont [7/16] 0.0, 128
    %88 = vxpose.xlu0.b32.cont [8/16] 0.0, 128
    %89 = vxpose.xlu0.b32.cont [9/16] 0.0, 128
    %90 = vxpose.xlu0.b32.cont [10/16] 0.0, 128
    %91 = vxpose.xlu0.b32.cont [11/16] 0.0, 128
    %92 = vxpose.xlu0.b32.cont [12/16] 0.0, 128
    %93 = vxpose.xlu0.b32.cont [13/16] 0.0, 128
    %94 = vxpose.xlu0.b32.cont [14/16] 0.0, 128
    %95 = vxpose.xlu0.b32.cont [15/16] 0.0, 128
    %96 = vxpose.xlu0.b32.end [16/16] 0.0, 128
    %v97 = vpop.trf.xlu0
    %v98 = vpop.trf.xlu0
    %v99 = vpop.trf.xlu0
    %v100 = vpop.trf.xlu0
    %v101 = vpop.trf.xlu0
    %v102 = vpop.trf.xlu0
    %v103 = vpop.trf.xlu0
    %v104 = vpop.trf.xlu0
    %v105 = vpop.trf.xlu0
    %v106 = vpop.trf.xlu0
    %v107 = vpop.trf.xlu0
    %v108 = vpop.trf.xlu0
    %v109 = vpop.trf.xlu0
    %v110 = vpop.trf.xlu0
    %v111 = vpop.trf.xlu0
    %v112 = vpop.trf.xlu0
    %v113 = vlaneseq
    %v114 = vshrl.u32 %v113, 7
    %v115 = vsub.s32 0, %v114
    %v116 = vrot.slane %v97, %v115
    %118 = vbcast.lane.b32.xlu0 %v116, 256
    %v119 = vpop.permute.xlu0 %118
    %v120 = vlaneseq
    %v121 = vshrl.u32 %v120, 7
    %v122 = vsub.s32 1, %v121
    %v123 = vrot.slane %v97, %v122
    %125 = vbcast.lane.b32.xlu0 %v123, 256
    %v126 = vpop.permute.xlu0 %125
    %v127 = vlaneseq
    %v128 = vshrl.u32 %v127, 7
    %v129 = vsub.s32 2, %v128
    %v130 = vrot.slane %v97, %v129
    %132 = vbcast.lane.b32.xlu0 %v130, 256
    %v133 = vpop.permute.xlu0 %132
    %v134 = vlaneseq
    %v135 = vshrl.u32 %v134, 7
    %v136 = vsub.s32 3, %v135
    %v137 = vrot.slane %v97, %v136
    %139 = vbcast.lane.b32.xlu0 %v137, 256
    %v140 = vpop.permute.xlu0 %139
    %v141 = vlaneseq
    %v142 = vshrl.u32 %v141, 7
    %v143 = vsub.s32 4, %v142
    %v144 = vrot.slane %v97, %v143
    %146 = vbcast.lane.b32.xlu0 %v144, 256
    %v147 = vpop.permute.xlu0 %146
    %v148 = vlaneseq
    %v149 = vshrl.u32 %v148, 7
    %v150 = vsub.s32 5, %v149
    %v151 = vrot.slane %v97, %v150
    %153 = vbcast.lane.b32.xlu0 %v151, 256
    %v154 = vpop.permute.xlu0 %153
    %v155 = vlaneseq
    %v156 = vshrl.u32 %v155, 7
    %v157 = vsub.s32 6, %v156
    %v158 = vrot.slane %v97, %v157
    %160 = vbcast.lane.b32.xlu0 %v158, 256
    %v161 = vpop.permute.xlu0 %160
    %v162 = vlaneseq
    %v163 = vshrl.u32 %v162, 7
    %v164 = vsub.s32 7, %v163
    %v165 = vrot.slane %v97, %v164
    %167 = vbcast.lane.b32.xlu0 %v165, 256
    %v168 = vpop.permute.xlu0 %167
    %v169 = vld [vmem:[#allocation6] sm:$0xf]
    %v171 = vlaneseq
    %v172 = vshrl.u32 %v171, 7
    %v173 = vsub.s32 0, %v172
    %v174 = vrot.slane %v169, %v173
    %v175 = vlaneseq
    %v176 = vshrl.u32 %v175, 7
    %v177 = vsub.s32 1, %v176
    %v178 = vrot.slane %v169, %v177
    %v179 = vlaneseq
    %v180 = vshrl.u32 %v179, 7
    %v181 = vsub.s32 2, %v180
    %v182 = vrot.slane %v169, %v181
    %v183 = vlaneseq
    %v184 = vshrl.u32 %v183, 7
    %v185 = vsub.s32 3, %v184
    %v186 = vrot.slane %v169, %v185
    %v191 = vmul.f32 %v119, %v174
    %v192 = vmul.f32 %v119, %v178
    %v193 = vmul.f32 %v119, %v182
    %v194 = vmul.f32 %v119, %v186
    %v195 = vmul.f32 %v126, %v174
    %v196 = vmul.f32 %v126, %v178
    %v197 = vmul.f32 %v126, %v182
    %v198 = vmul.f32 %v126, %v186
    %v199 = vmul.f32 %v133, %v174
    %v200 = vmul.f32 %v133, %v178
    %v201 = vmul.f32 %v133, %v182
    %v202 = vmul.f32 %v133, %v186
    %v203 = vmul.f32 %v140, %v174
    %v204 = vmul.f32 %v140, %v178
    %v205 = vmul.f32 %v140, %v182
    %v206 = vmul.f32 %v140, %v186
    %v207 = vmul.f32 %v147, %v174
    %v208 = vmul.f32 %v147, %v178
    %v209 = vmul.f32 %v147, %v182
    %v210 = vmul.f32 %v147, %v186
    %v211 = vmul.f32 %v154, %v174
    %v212 = vmul.f32 %v154, %v178
    %v213 = vmul.f32 %v154, %v182
    %v214 = vmul.f32 %v154, %v186
    %v215 = vmul.f32 %v161, %v174
    %v216 = vmul.f32 %v161, %v178
    %v217 = vmul.f32 %v161, %v182
    %v218 = vmul.f32 %v161, %v186
    %v219 = vmul.f32 %v168, %v174
    %v220 = vmul.f32 %v168, %v178
    %v221 = vmul.f32 %v168, %v182
    %v222 = vmul.f32 %v168, %v186
    %v223 = vld [vmem:[%s3] sm:$0xf]
    %v225 = vlaneseq
    %v226 = vshrl.u32 %v225, 7
    %v227 = vsub.s32 0, %v226
    %v228 = vrot.slane %v223, %v227
    %v229 = vlaneseq
    %v230 = vshrl.u32 %v229, 7
    %v231 = vsub.s32 1, %v230
    %v232 = vrot.slane %v223, %v231
    %v233 = vlaneseq
    %v234 = vshrl.u32 %v233, 7
    %v235 = vsub.s32 2, %v234
    %v236 = vrot.slane %v223, %v235
    %v237 = vlaneseq
    %v238 = vshrl.u32 %v237, 7
    %v239 = vsub.s32 3, %v238
    %v240 = vrot.slane %v223, %v239
    %v245 = vadd.f32 %v191, %v228
    %v246 = vadd.f32 %v192, %v232
    %v247 = vadd.f32 %v193, %v236
    %v248 = vadd.f32 %v194, %v240
    %v249 = vadd.f32 %v195, %v228
    %v250 = vadd.f32 %v196, %v232
    %v251 = vadd.f32 %v197, %v236
    %v252 = vadd.f32 %v198, %v240
    %v253 = vadd.f32 %v199, %v228
    %v254 = vadd.f32 %v200, %v232
    %v255 = vadd.f32 %v201, %v236
    %v256 = vadd.f32 %v202, %v240
    %v257 = vadd.f32 %v203, %v228
    %v258 = vadd.f32 %v204, %v232
    %v259 = vadd.f32 %v205, %v236
    %v260 = vadd.f32 %v206, %v240
    %v261 = vadd.f32 %v207, %v228
    %v262 = vadd.f32 %v208, %v232
    %v263 = vadd.f32 %v209, %v236
    %v264 = vadd.f32 %v210, %v240
    %v265 = vadd.f32 %v211, %v228
    %v266 = vadd.f32 %v212, %v232
    %v267 = vadd.f32 %v213, %v236
    %v268 = vadd.f32 %v214, %v240
    %v269 = vadd.f32 %v215, %v228
    %v270 = vadd.f32 %v216, %v232
    %v271 = vadd.f32 %v217, %v236
    %v272 = vadd.f32 %v218, %v240
    %v273 = vadd.f32 %v219, %v228
    %v274 = vadd.f32 %v220, %v232
    %v275 = vadd.f32 %v221, %v236
    %v276 = vadd.f32 %v222, %v240
    %277 = vst [vmem:[#allocation2] sm:$0xff] %v245
    %278 = vst [vmem:[#allocation2 + $0x8] sm:$0xff] %v246
    %279 = vst [vmem:[#allocation2 + $0x10] sm:$0xff] %v247
    %280 = vst [vmem:[#allocation2 + $0x18] sm:$0xff] %v248
    %281 = vst [vmem:[#allocation2 + $0x20] sm:$0xff] %v249
    %282 = vst [vmem:[#allocation2 + $0x28] sm:$0xff] %v250
    %283 = vst [vmem:[#allocation2 + $0x30] sm:$0xff] %v251
    %284 = vst [vmem:[#allocation2 + $0x38] sm:$0xff] %v252
    %285 = vst [vmem:[#allocation2 + $0x40] sm:$0xff] %v253
    %286 = vst [vmem:[#allocation2 + $0x48] sm:$0xff] %v254
    %287 = vst [vmem:[#allocation2 + $0x50] sm:$0xff] %v255
    %288 = vst [vmem:[#allocation2 + $0x58] sm:$0xff] %v256
    %289 = vst [vmem:[#allocation2 + $0x60] sm:$0xff] %v257
    %290 = vst [vmem:[#allocation2 + $0x68] sm:$0xff] %v258
    %291 = vst [vmem:[#allocation2 + $0x70] sm:$0xff] %v259
    %292 = vst [vmem:[#allocation2 + $0x78] sm:$0xff] %v260
    %293 = vst [vmem:[#allocation2 + $0x80] sm:$0xff] %v261
    %294 = vst [vmem:[#allocation2 + $0x88] sm:$0xff] %v262
    %295 = vst [vmem:[#allocation2 + $0x90] sm:$0xff] %v263
    %296 = vst [vmem:[#allocation2 + $0x98] sm:$0xff] %v264
    %297 = vst [vmem:[#allocation2 + $0xa0] sm:$0xff] %v265
    %298 = vst [vmem:[#allocation2 + $0xa8] sm:$0xff] %v266
    %299 = vst [vmem:[#allocation2 + $0xb0] sm:$0xff] %v267
    %300 = vst [vmem:[#allocation2 + $0xb8] sm:$0xff] %v268
    %301 = vst [vmem:[#allocation2 + $0xc0] sm:$0xff] %v269
    %302 = vst [vmem:[#allocation2 + $0xc8] sm:$0xff] %v270
    %303 = vst [vmem:[#allocation2 + $0xd0] sm:$0xff] %v271
    %304 = vst [vmem:[#allocation2 + $0xd8] sm:$0xff] %v272
    %305 = vst [vmem:[#allocation2 + $0xe0] sm:$0xff] %v273
    %306 = vst [vmem:[#allocation2 + $0xe8] sm:$0xff] %v274
    %307 = vst [vmem:[#allocation2 + $0xf0] sm:$0xff] %v275
    %308 = vst [vmem:[#allocation2 + $0xf8] sm:$0xff] %v276
    %v309 = vld [vmem:[#allocation2] sm:$0xff]
    %v310 = vld [vmem:[#allocation2 + $0x10] sm:$0xff]
    %v311 = vld [vmem:[#allocation2 + $0x18] sm:$0xff]
    %v312 = vmul.f32 %v309, 0.5
    %v313 = vtanh.pop %v312
    %v314 = vmul.f32 %v313, 0.5
    %v315 = vadd.f32 %v314, 0.5
    %v316 = vtanh.pop %v310
    %v317 = vmul.f32 %v311, 0.5
    %v318 = vtanh.pop %v317
    %v319 = vmul.f32 %v318, 0.5
    %v320 = vadd.f32 %v319, 0.5
    %v321 = vmul.f32 %v315, %v316
    %v322 = vtanh.pop %v321
    %v323 = vmul.f32 %v320, %v322
    %s324 = scalar_lea.vmem [#allocation2], 32
    %v325 = vld [vmem:[%s324] sm:$0xff]
    %v326 = vld [vmem:[%s324 + $0x8] sm:$0xff]
    %v327 = vld [vmem:[%s324 + $0x10] sm:$0xff]
    %v328 = vld [vmem:[%s324 + $0x18] sm:$0xff]
    %v329 = vpack.c.bf16 %v323, %v323
    %v330 = vld [vmem:[#allocation8] sm:$0xff]
    %v331 = vld [vmem:[#allocation8 + $0x8] sm:$0xff]
    %v332 = vld [vmem:[#allocation8 + $0x10] sm:$0xff]
    %v333 = vld [vmem:[#allocation8 + $0x18] sm:$0xff]
    %v334 = vld [vmem:[#allocation8 + $0x20] sm:$0xff]
    %v335 = vld [vmem:[#allocation8 + $0x28] sm:$0xff]
    %v336 = vld [vmem:[#allocation8 + $0x30] sm:$0xff]
    %v337 = vld [vmem:[#allocation8 + $0x38] sm:$0xff]
    %v338 = vld [vmem:[#allocation8 + $0x40] sm:$0xff]
    %v339 = vld [vmem:[#allocation8 + $0x48] sm:$0xff]
    %v340 = vld [vmem:[#allocation8 + $0x50] sm:$0xff]
    %v341 = vld [vmem:[#allocation8 + $0x58] sm:$0xff]
    %v342 = vld [vmem:[#allocation8 + $0x60] sm:$0xff]
    %v343 = vld [vmem:[#allocation8 + $0x68] sm:$0xff]
    %v344 = vld [vmem:[#allocation8 + $0x70] sm:$0xff]
    %v345 = vld [vmem:[#allocation8 + $0x78] sm:$0xff]
    %v346 = vld [vmem:[#allocation8 + $0x80] sm:$0xff]
    %v347 = vld [vmem:[#allocation8 + $0x88] sm:$0xff]
    %v348 = vld [vmem:[#allocation8 + $0x90] sm:$0xff]
    %v349 = vld [vmem:[#allocation8 + $0x98] sm:$0xff]
    %v350 = vld [vmem:[#allocation8 + $0xa0] sm:$0xff]
    %v351 = vld [vmem:[#allocation8 + $0xa8] sm:$0xff]
    %v352 = vld [vmem:[#allocation8 + $0xb0] sm:$0xff]
    %v353 = vld [vmem:[#allocation8 + $0xb8] sm:$0xff]
    %v354 = vld [vmem:[#allocation8 + $0xc0] sm:$0xff]
    %v355 = vld [vmem:[#allocation8 + $0xc8] sm:$0xff]
    %v356 = vld [vmem:[#allocation8 + $0xd0] sm:$0xff]
    %v357 = vld [vmem:[#allocation8 + $0xd8] sm:$0xff]
    %v358 = vld [vmem:[#allocation8 + $0xe0] sm:$0xff]
    %v359 = vld [vmem:[#allocation8 + $0xe8] sm:$0xff]
    %v360 = vld [vmem:[#allocation8 + $0xf0] sm:$0xff]
    %v361 = vld [vmem:[#allocation8 + $0xf8] sm:$0xff]
    %v394 = vunpack.c.l.b16 %v330
    %v395 = vunpack.c.h.b16 %v330
    %v396 = vunpack.c.l.b16 %v331
    %v397 = vunpack.c.h.b16 %v331
    %v398 = vunpack.c.l.b16 %v332
    %v399 = vunpack.c.h.b16 %v332
    %v400 = vunpack.c.l.b16 %v333
    %v401 = vunpack.c.h.b16 %v333
    %v402 = vunpack.c.l.b16 %v334
    %v403 = vunpack.c.h.b16 %v334
    %v404 = vunpack.c.l.b16 %v335
    %v405 = vunpack.c.h.b16 %v335
    %v406 = vunpack.c.l.b16 %v336
    %v407 = vunpack.c.h.b16 %v336
    %v408 = vunpack.c.l.b16 %v337
    %v409 = vunpack.c.h.b16 %v337
    %v410 = vunpack.c.l.b16 %v338
    %v411 = vunpack.c.h.b16 %v338
    %v412 = vunpack.c.l.b16 %v339
    %v413 = vunpack.c.h.b16 %v339
    %v414 = vunpack.c.l.b16 %v340
    %v415 = vunpack.c.h.b16 %v340
    %v416 = vunpack.c.l.b16 %v341
    %v417 = vunpack.c.h.b16 %v341
    %v418 = vunpack.c.l.b16 %v342
    %v419 = vunpack.c.h.b16 %v342
    %v420 = vunpack.c.l.b16 %v343
    %v421 = vunpack.c.h.b16 %v343
    %v422 = vunpack.c.l.b16 %v344
    %v423 = vunpack.c.h.b16 %v344
    %v424 = vunpack.c.l.b16 %v345
    %v425 = vunpack.c.h.b16 %v345
    %v426 = vunpack.c.l.b16 %v346
    %v427 = vunpack.c.h.b16 %v346
    %v428 = vunpack.c.l.b16 %v347
    %v429 = vunpack.c.h.b16 %v347
    %v430 = vunpack.c.l.b16 %v348
    %v431 = vunpack.c.h.b16 %v348
    %v432 = vunpack.c.l.b16 %v349
    %v433 = vunpack.c.h.b16 %v349
    %v434 = vunpack.c.l.b16 %v350
    %v435 = vunpack.c.h.b16 %v350
    %v436 = vunpack.c.l.b16 %v351
    %v437 = vunpack.c.h.b16 %v351
    %v438 = vunpack.c.l.b16 %v352
    %v439 = vunpack.c.h.b16 %v352
    %v440 = vunpack.c.l.b16 %v353
    %v441 = vunpack.c.h.b16 %v353
    %v442 = vunpack.c.l.b16 %v354
    %v443 = vunpack.c.h.b16 %v354
    %v444 = vunpack.c.l.b16 %v355
    %v445 = vunpack.c.h.b16 %v355
    %v446 = vunpack.c.l.b16 %v356
    %v447 = vunpack.c.h.b16 %v356
    %v448 = vunpack.c.l.b16 %v357
    %v449 = vunpack.c.h.b16 %v357
    %v450 = vunpack.c.l.b16 %v358
    %v451 = vunpack.c.h.b16 %v358
    %v452 = vunpack.c.l.b16 %v359
    %v453 = vunpack.c.h.b16 %v359
    %v454 = vunpack.c.l.b16 %v360
    %v455 = vunpack.c.h.b16 %v360
    %v456 = vunpack.c.l.b16 %v361
    %v457 = vunpack.c.h.b16 %v361
    %v458 = vpack.c.b16 %v398, %v394
    %v459 = vpack.c.b16 %v399, %v395
    %v460 = vpack.c.b16 %v400, %v396
    %v461 = vpack.c.b16 %v401, %v397
    %v462 = vpack.c.b16 %v406, %v402
    %v463 = vpack.c.b16 %v407, %v403
    %v464 = vpack.c.b16 %v408, %v404
    %v465 = vpack.c.b16 %v409, %v405
    %v466 = vpack.c.b16 %v414, %v410
    %v467 = vpack.c.b16 %v415, %v411
    %v468 = vpack.c.b16 %v416, %v412
    %v469 = vpack.c.b16 %v417, %v413
    %v470 = vpack.c.b16 %v422, %v418
    %v471 = vpack.c.b16 %v423, %v419
    %v472 = vpack.c.b16 %v424, %v420
    %v473 = vpack.c.b16 %v425, %v421
    %v474 = vpack.c.b16 %v430, %v426
    %v475 = vpack.c.b16 %v431, %v427
    %v476 = vpack.c.b16 %v432, %v428
    %v477 = vpack.c.b16 %v433, %v429
    %v478 = vpack.c.b16 %v438, %v434
    %v479 = vpack.c.b16 %v439, %v435
    %v480 = vpack.c.b16 %v440, %v436
    %v481 = vpack.c.b16 %v441, %v437
    %v482 = vpack.c.b16 %v446, %v442
    %v483 = vpack.c.b16 %v447, %v443
    %v484 = vpack.c.b16 %v448, %v444
    %v485 = vpack.c.b16 %v449, %v445
    %v486 = vpack.c.b16 %v454, %v450
    %v487 = vpack.c.b16 %v455, %v451
    %v488 = vpack.c.b16 %v456, %v452
    %v489 = vpack.c.b16 %v457, %v453
    %522 = vmatprep.subr.bf16.mxu0 %v459
    %523 = vmatpush1.bf16.msra.mxu0 %v458
    %524 = vmatprep.subr.bf16.mxu0 %v463
    %525 = vmatpush1.bf16.msra.mxu0 %v462
    %526 = vmatprep.subr.bf16.mxu0 %v467
    %527 = vmatpush1.bf16.msra.mxu0 %v466
    %528 = vmatprep.subr.bf16.mxu0 %v471
    %529 = vmatpush1.bf16.msra.mxu0 %v470
    %530 = vmatprep.subr.bf16.mxu0 %v475
    %531 = vmatpush1.bf16.msra.mxu0 %v474
    %532 = vmatprep.subr.bf16.mxu0 %v479
    %533 = vmatpush1.bf16.msra.mxu0 %v478
    %534 = vmatprep.subr.bf16.mxu0 %v483
    %535 = vmatpush1.bf16.msra.mxu0 %v482
    %536 = vmatprep.subr.bf16.mxu0 %v487
    %537 = vmatpush1.bf16.msra.mxu0 %v486
    %538 = vmatprep.subr.bf16.mxu0 0
    %539 = vmatpush1.bf16.msra.mxu0 0
    %540 = vmatprep.subr.bf16.mxu0 0
    %541 = vmatpush1.bf16.msra.mxu0 0
    %542 = vmatprep.subr.bf16.mxu0 0
    %543 = vmatpush1.bf16.msra.mxu0 0
    %544 = vmatprep.subr.bf16.mxu0 0
    %545 = vmatpush1.bf16.msra.mxu0 0
    %546 = vmatprep.subr.bf16.mxu0 0
    %547 = vmatpush1.bf16.msra.mxu0 0
    %548 = vmatprep.subr.bf16.mxu0 0
    %549 = vmatpush1.bf16.msra.mxu0 0
    %550 = vmatprep.subr.bf16.mxu0 0
    %551 = vmatpush1.bf16.msra.mxu0 0
    %552 = vmatprep.subr.bf16.mxu0 0
    %553 = vmatpush1.bf16.msra.mxu0 0
    %554 = vmatprep.mubr.bf16.mxu0 0
    %555 = vmatmul.mubr.bf16.gmra.mrb[0].mxu0 %v329
    %v556 = vpop.f32.mrb[0].mxu0
    %v557 = vadd.f32 0.0, %v556
    %v558 = vpop.f32.mrb[0].mxu0
    %v559 = vadd.f32 0.0, %v558
    %v560 = vpop.f32.mrb[0].mxu0
    %v561 = vpop.f32.mrb[0].mxu0
    %562 = vdwg.mxu0
    %563 = vmatprep.subr.bf16.mxu0 %v461
    %564 = vmatpush1.bf16.msra.mxu0 %v460
    %565 = vmatprep.subr.bf16.mxu0 %v465
    %566 = vmatpush1.bf16.msra.mxu0 %v464
    %567 = vmatprep.subr.bf16.mxu0 %v469
    %568 = vmatpush1.bf16.msra.mxu0 %v468
    %569 = vmatprep.subr.bf16.mxu0 %v473
    %570 = vmatpush1.bf16.msra.mxu0 %v472
    %571 = vmatprep.subr.bf16.mxu0 %v477
    %572 = vmatpush1.bf16.msra.mxu0 %v476
    %573 = vmatprep.subr.bf16.mxu0 %v481
    %574 = vmatpush1.bf16.msra.mxu0 %v480
    %575 = vmatprep.subr.bf16.mxu0 %v485
    %576 = vmatpush1.bf16.msra.mxu0 %v484
    %577 = vmatprep.subr.bf16.mxu0 %v489
    %578 = vmatpush1.bf16.msra.mxu0 %v488
    %579 = vmatprep.subr.bf16.mxu0 0
    %580 = vmatpush1.bf16.msra.mxu0 0
    %581 = vmatprep.subr.bf16.mxu0 0
    %582 = vmatpush1.bf16.msra.mxu0 0
    %583 = vmatprep.subr.bf16.mxu0 0
    %584 = vmatpush1.bf16.msra.mxu0 0
    %585 = vmatprep.subr.bf16.mxu0 0
    %586 = vmatpush1.bf16.msra.mxu0 0
    %587 = vmatprep.subr.bf16.mxu0 0
    %588 = vmatpush1.bf16.msra.mxu0 0
    %589 = vmatprep.subr.bf16.mxu0 0
    %590 = vmatpush1.bf16.msra.mxu0 0
    %591 = vmatprep.subr.bf16.mxu0 0
    %592 = vmatpush1.bf16.msra.mxu0 0
    %593 = vmatprep.subr.bf16.mxu0 0
    %594 = vmatpush1.bf16.msra.mxu0 0
    %595 = vmatprep.mubr.bf16.mxu0 0
    %596 = vmatmul.mubr.bf16.gmra.mrb[0].mxu0 %v329
    %v597 = vpop.f32.mrb[0].mxu0
    %v598 = vadd.f32 0.0, %v597
    %v599 = vpop.f32.mrb[0].mxu0
    %v600 = vadd.f32 0.0, %v599
    %v601 = vpop.f32.mrb[0].mxu0
    %v602 = vpop.f32.mrb[0].mxu0
    %603 = vdwg.mxu0
    %v604 = vadd.f32 %v325, %v557
    %v605 = vadd.f32 %v326, %v559
    %v606 = vadd.f32 %v327, %v598
    %v607 = vadd.f32 %v328, %v600
    %v608 = vmul.f32 %v604, 0.5
    %v609 = vtanh.pop %v608
    %v610 = vmul.f32 %v609, 0.5
    %v611 = vadd.f32 %v610, 0.5
    %v612 = vtanh.pop %v606
    %v613 = vmul.f32 %v607, 0.5
    %v614 = vtanh.pop %v613
    %v615 = vmul.f32 %v614, 0.5
    %v616 = vadd.f32 %v615, 0.5
    %v617 = vmul.f32 %v605, 0.5
    %v618 = vtanh.pop %v617
    %v619 = vmul.f32 %v618, 0.5
    %v620 = vadd.f32 %v619, 0.5
    %v621 = vmul.f32 %v620, %v321
    %v622 = vmul.f32 %v611, %v612
    %v623 = vadd.f32 %v621, %v622
    %v624 = vtanh.pop %v623
    %v625 = vmul.f32 %v616, %v624
    %s626 = scalar_lea.vmem [#allocation2], 64
    %v627 = vld [vmem:[%s626] sm:$0xff]
    %v628 = vld [vmem:[%s626 + $0x8] sm:$0xff]
    %v629 = vld [vmem:[%s626 + $0x10] sm:$0xff]
    %v630 = vld [vmem:[%s626 + $0x18] sm:$0xff]
    %v631 = vpack.c.bf16 %v625, %v625
    %632 = vmatprep.subr.bf16.mxu0 %v459
    %633 = vmatpush1.bf16.msra.mxu0 %v458
    %634 = vmatprep.subr.bf16.mxu0 %v463
    %635 = vmatpush1.bf16.msra.mxu0 %v462
    %636 = vmatprep.subr.bf16.mxu0 %v467
    %637 = vmatpush1.bf16.msra.mxu0 %v466
    %638 = vmatprep.subr.bf16.mxu0 %v471
    %639 = vmatpush1.bf16.msra.mxu0 %v470
    %640 = vmatprep.subr.bf16.mxu0 %v475
    %641 = vmatpush1.bf16.msra.mxu0 %v474
    %642 = vmatprep.subr.bf16.mxu0 %v479
    %643 = vmatpush1.bf16.msra.mxu0 %v478
    %644 = vmatprep.subr.bf16.mxu0 %v483
    %645 = vmatpush1.bf16.msra.mxu0 %v482
    %646 = vmatprep.subr.bf16.mxu0 %v487
    %647 = vmatpush1.bf16.msra.mxu0 %v486
    %648 = vmatprep.subr.bf16.mxu0 0
    %649 = vmatpush1.bf16.msra.mxu0 0
    %650 = vmatprep.subr.bf16.mxu0 0
    %651 = vmatpush1.bf16.msra.mxu0 0
    %652 = vmatprep.subr.bf16.mxu0 0
    %653 = vmatpush1.bf16.msra.mxu0 0
    %654 = vmatprep.subr.bf16.mxu0 0
    %655 = vmatpush1.bf16.msra.mxu0 0
    %656 = vmatprep.subr.bf16.mxu0 0
    %657 = vmatpush1.bf16.msra.mxu0 0
    %658 = vmatprep.subr.bf16.mxu0 0
    %659 = vmatpush1.bf16.msra.mxu0 0
    %660 = vmatprep.subr.bf16.mxu0 0
    %661 = vmatpush1.bf16.msra.mxu0 0
    %662 = vmatprep.subr.bf16.mxu0 0
    %663 = vmatpush1.bf16.msra.mxu0 0
    %664 = vmatprep.mubr.bf16.mxu0 0
    %665 = vmatmul.mubr.bf16.gmra.mrb[0].mxu0 %v631
    %v666 = vpop.f32.mrb[0].mxu0
    %v667 = vadd.f32 0.0, %v666
    %v668 = vpop.f32.mrb[0].mxu0
    %v669 = vadd.f32 0.0, %v668
    %v670 = vpop.f32.mrb[0].mxu0
    %v671 = vpop.f32.mrb[0].mxu0
    %672 = vdwg.mxu0
    %673 = vmatprep.subr.bf16.mxu0 %v461
    %674 = vmatpush1.bf16.msra.mxu0 %v460
    %675 = vmatprep.subr.bf16.mxu0 %v465
    %676 = vmatpush1.bf16.msra.mxu0 %v464
    %677 = vmatprep.subr.bf16.mxu0 %v469
    %678 = vmatpush1.bf16.msra.mxu0 %v468
    %679 = vmatprep.subr.bf16.mxu0 %v473
    %680 = vmatpush1.bf16.msra.mxu0 %v472
    %681 = vmatprep.subr.bf16.mxu0 %v477
    %682 = vmatpush1.bf16.msra.mxu0 %v476
    %683 = vmatprep.subr.bf16.mxu0 %v481
    %684 = vmatpush1.bf16.msra.mxu0 %v480
    %685 = vmatprep.subr.bf16.mxu0 %v485
    %686 = vmatpush1.bf16.msra.mxu0 %v484
    %687 = vmatprep.subr.bf16.mxu0 %v489
    %688 = vmatpush1.bf16.msra.mxu0 %v488
    %689 = vmatprep.subr.bf16.mxu0 0
    %690 = vmatpush1.bf16.msra.mxu0 0
    %691 = vmatprep.subr.bf16.mxu0 0
    %692 = vmatpush1.bf16.msra.mxu0 0
    %693 = vmatprep.subr.bf16.mxu0 0
    %694 = vmatpush1.bf16.msra.mxu0 0
    %695 = vmatprep.subr.bf16.mxu0 0
    %696 = vmatpush1.bf16.msra.mxu0 0
    %697 = vmatprep.subr.bf16.mxu0 0
    %698 = vmatpush1.bf16.msra.mxu0 0
    %699 = vmatprep.subr.bf16.mxu0 0
    %700 = vmatpush1.bf16.msra.mxu0 0
    %701 = vmatprep.subr.bf16.mxu0 0
    %702 = vmatpush1.bf16.msra.mxu0 0
    %703 = vmatprep.subr.bf16.mxu0 0
    %704 = vmatpush1.bf16.msra.mxu0 0
    %705 = vmatprep.mubr.bf16.mxu0 0
    %706 = vmatmul.mubr.bf16.gmra.mrb[0].mxu0 %v631
    %v707 = vpop.f32.mrb[0].mxu0
    %v708 = vadd.f32 0.0, %v707
    %v709 = vpop.f32.mrb[0].mxu0
    %v710 = vadd.f32 0.0, %v709
    %v711 = vpop.f32.mrb[0].mxu0
    %v712 = vpop.f32.mrb[0].mxu0
    %713 = vdwg.mxu0
    %v714 = vadd.f32 %v627, %v667
    %v715 = vadd.f32 %v628, %v669
    %v716 = vadd.f32 %v629, %v708
    %v717 = vadd.f32 %v630, %v710
    %v718 = vmul.f32 %v714, 0.5
    %v719 = vtanh.pop %v718
    %v720 = vmul.f32 %v719, 0.5
    %v721 = vadd.f32 %v720, 0.5
    %v722 = vtanh.pop %v716
    %v723 = vmul.f32 %v717, 0.5
    %v724 = vtanh.pop %v723
    %v725 = vmul.f32 %v724, 0.5
    %v726 = vadd.f32 %v725, 0.5
    %v727 = vmul.f32 %v715, 0.5
    %v728 = vtanh.pop %v727
    %v729 = vmul.f32 %v728, 0.5
    %v730 = vadd.f32 %v729, 0.5
    %v731 = vmul.f32 %v730, %v623
    %v732 = vmul.f32 %v721, %v722
    %v733 = vadd.f32 %v731, %v732
    %v734 = vtanh.pop %v733
    %v735 = vmul.f32 %v726, %v734
    %s736 = scalar_lea.vmem [#allocation2], 96
    %v737 = vld [vmem:[%s736] sm:$0xff]
    %v738 = vld [vmem:[%s736 + $0x8] sm:$0xff]
    %v739 = vld [vmem:[%s736 + $0x10] sm:$0xff]
    %v740 = vld [vmem:[%s736 + $0x18] sm:$0xff]
    %v741 = vpack.c.bf16 %v735, %v735
    %742 = vmatprep.subr.bf16.mxu0 %v459
    %743 = vmatpush1.bf16.msra.mxu0 %v458
    %744 = vmatprep.subr.bf16.mxu0 %v463
    %745 = vmatpush1.bf16.msra.mxu0 %v462
    %746 = vmatprep.subr.bf16.mxu0 %v467
    %747 = vmatpush1.bf16.msra.mxu0 %v466
    %748 = vmatprep.subr.bf16.mxu0 %v471
    %749 = vmatpush1.bf16.msra.mxu0 %v470
    %750 = vmatprep.subr.bf16.mxu0 %v475
    %751 = vmatpush1.bf16.msra.mxu0 %v474
    %752 = vmatprep.subr.bf16.mxu0 %v479
    %753 = vmatpush1.bf16.msra.mxu0 %v478
    %754 = vmatprep.subr.bf16.mxu0 %v483
    %755 = vmatpush1.bf16.msra.mxu0 %v482
    %756 = vmatprep.subr.bf16.mxu0 %v487
    %757 = vmatpush1.bf16.msra.mxu0 %v486
    %758 = vmatprep.subr.bf16.mxu0 0
    %759 = vmatpush1.bf16.msra.mxu0 0
    %760 = vmatprep.subr.bf16.mxu0 0
    %761 = vmatpush1.bf16.msra.mxu0 0
    %762 = vmatprep.subr.bf16.mxu0 0
    %763 = vmatpush1.bf16.msra.mxu0 0
    %764 = vmatprep.subr.bf16.mxu0 0
    %765 = vmatpush1.bf16.msra.mxu0 0
    %766 = vmatprep.subr.bf16.mxu0 0
    %767 = vmatpush1.bf16.msra.mxu0 0
    %768 = vmatprep.subr.bf16.mxu0 0
    %769 = vmatpush1.bf16.msra.mxu0 0
    %770 = vmatprep.subr.bf16.mxu0 0
    %771 = vmatpush1.bf16.msra.mxu0 0
    %772 = vmatprep.subr.bf16.mxu0 0
    %773 = vmatpush1.bf16.msra.mxu0 0
    %774 = vmatprep.mubr.bf16.mxu0 0
    %775 = vmatmul.mubr.bf16.gmra.mrb[0].mxu0 %v741
    %v776 = vpop.f32.mrb[0].mxu0
    %v777 = vadd.f32 0.0, %v776
    %v778 = vpop.f32.mrb[0].mxu0
    %v779 = vadd.f32 0.0, %v778
    %v780 = vpop.f32.mrb[0].mxu0
    %v781 = vpop.f32.mrb[0].mxu0
    %782 = vdwg.mxu0
    %783 = vmatprep.subr.bf16.mxu0 %v461
    %784 = vmatpush1.bf16.msra.mxu0 %v460
    %785 = vmatprep.subr.bf16.mxu0 %v465
    %786 = vmatpush1.bf16.msra.mxu0 %v464
    %787 = vmatprep.subr.bf16.mxu0 %v469
    %788 = vmatpush1.bf16.msra.mxu0 %v468
    %789 = vmatprep.subr.bf16.mxu0 %v473
    %790 = vmatpush1.bf16.msra.mxu0 %v472
    %791 = vmatprep.subr.bf16.mxu0 %v477
    %792 = vmatpush1.bf16.msra.mxu0 %v476
    %793 = vmatprep.subr.bf16.mxu0 %v481
    %794 = vmatpush1.bf16.msra.mxu0 %v480
    %795 = vmatprep.subr.bf16.mxu0 %v485
    %796 = vmatpush1.bf16.msra.mxu0 %v484
    %797 = vmatprep.subr.bf16.mxu0 %v489
    %798 = vmatpush1.bf16.msra.mxu0 %v488
    %799 = vmatprep.subr.bf16.mxu0 0
    %800 = vmatpush1.bf16.msra.mxu0 0
    %801 = vmatprep.subr.bf16.mxu0 0
    %802 = vmatpush1.bf16.msra.mxu0 0
    %803 = vmatprep.subr.bf16.mxu0 0
    %804 = vmatpush1.bf16.msra.mxu0 0
    %805 = vmatprep.subr.bf16.mxu0 0
    %806 = vmatpush1.bf16.msra.mxu0 0
    %807 = vmatprep.subr.bf16.mxu0 0
    %808 = vmatpush1.bf16.msra.mxu0 0
    %809 = vmatprep.subr.bf16.mxu0 0
    %810 = vmatpush1.bf16.msra.mxu0 0
    %811 = vmatprep.subr.bf16.mxu0 0
    %812 = vmatpush1.bf16.msra.mxu0 0
    %813 = vmatprep.subr.bf16.mxu0 0
    %814 = vmatpush1.bf16.msra.mxu0 0
    %815 = vmatprep.mubr.bf16.mxu0 0
    %816 = vmatmul.mubr.bf16.gmra.mrb[0].mxu0 %v741
    %v817 = vpop.f32.mrb[0].mxu0
    %v818 = vadd.f32 0.0, %v817
    %v819 = vpop.f32.mrb[0].mxu0
    %v820 = vadd.f32 0.0, %v819
    %v821 = vpop.f32.mrb[0].mxu0
    %v822 = vpop.f32.mrb[0].mxu0
    %823 = vdwg.mxu0
    %v824 = vadd.f32 %v737, %v777
    %v825 = vadd.f32 %v738, %v779
    %v826 = vadd.f32 %v739, %v818
    %v827 = vadd.f32 %v740, %v820
    %v828 = vmul.f32 %v824, 0.5
    %v829 = vtanh.pop %v828
    %v830 = vmul.f32 %v829, 0.5
    %v831 = vadd.f32 %v830, 0.5
    %v832 = vtanh.pop %v826
    %v833 = vmul.f32 %v827, 0.5
    %v834 = vtanh.pop %v833
    %v835 = vmul.f32 %v834, 0.5
    %v836 = vadd.f32 %v835, 0.5
    %v837 = vmul.f32 %v825, 0.5
    %v838 = vtanh.pop %v837
    %v839 = vmul.f32 %v838, 0.5
    %v840 = vadd.f32 %v839, 0.5
    %v841 = vmul.f32 %v840, %v733
    %v842 = vmul.f32 %v831, %v832
    %v843 = vadd.f32 %v841, %v842
    %v844 = vtanh.pop %v843
    %v845 = vmul.f32 %v836, %v844
    %s846 = scalar_lea.vmem [#allocation2], 128
    %v847 = vld [vmem:[%s846] sm:$0xff]
    %v848 = vld [vmem:[%s846 + $0x8] sm:$0xff]
    %v849 = vld [vmem:[%s846 + $0x10] sm:$0xff]
    %v850 = vld [vmem:[%s846 + $0x18] sm:$0xff]
    %v851 = vpack.c.bf16 %v845, %v845
    %852 = vmatprep.subr.bf16.mxu0 %v459
    %853 = vmatpush1.bf16.msra.mxu0 %v458
    %854 = vmatprep.subr.bf16.mxu0 %v463
    %855 = vmatpush1.bf16.msra.mxu0 %v462
    %856 = vmatprep.subr.bf16.mxu0 %v467
    %857 = vmatpush1.bf16.msra.mxu0 %v466
    %858 = vmatprep.subr.bf16.mxu0 %v471
    %859 = vmatpush1.bf16.msra.mxu0 %v470
    %860 = vmatprep.subr.bf16.mxu0 %v475
    %861 = vmatpush1.bf16.msra.mxu0 %v474
    %862 = vmatprep.subr.bf16.mxu0 %v479
    %863 = vmatpush1.bf16.msra.mxu0 %v478
    %864 = vmatprep.subr.bf16.mxu0 %v483
    %865 = vmatpush1.bf16.msra.mxu0 %v482
    %866 = vmatprep.subr.bf16.mxu0 %v487
    %867 = vmatpush1.bf16.msra.mxu0 %v486
    %868 = vmatprep.subr.bf16.mxu0 0
    %869 = vmatpush1.bf16.msra.mxu0 0
    %870 = vmatprep.subr.bf16.mxu0 0
    %871 = vmatpush1.bf16.msra.mxu0 0
    %872 = vmatprep.subr.bf16.mxu0 0
    %873 = vmatpush1.bf16.msra.mxu0 0
    %874 = vmatprep.subr.bf16.mxu0 0
    %875 = vmatpush1.bf16.msra.mxu0 0
    %876 = vmatprep.subr.bf16.mxu0 0
    %877 = vmatpush1.bf16.msra.mxu0 0
    %878 = vmatprep.subr.bf16.mxu0 0
    %879 = vmatpush1.bf16.msra.mxu0 0
    %880 = vmatprep.subr.bf16.mxu0 0
    %881 = vmatpush1.bf16.msra.mxu0 0
    %882 = vmatprep.subr.bf16.mxu0 0
    %883 = vmatpush1.bf16.msra.mxu0 0
    %884 = vmatprep.mubr.bf16.mxu0 0
    %885 = vmatmul.mubr.bf16.gmra.mrb[0].mxu0 %v851
    %v886 = vpop.f32.mrb[0].mxu0
    %v887 = vadd.f32 0.0, %v886
    %v888 = vpop.f32.mrb[0].mxu0
    %v889 = vadd.f32 0.0, %v888
    %v890 = vpop.f32.mrb[0].mxu0
    %v891 = vpop.f32.mrb[0].mxu0
    %892 = vdwg.mxu0
    %893 = vmatprep.subr.bf16.mxu0 %v461
    %894 = vmatpush1.bf16.msra.mxu0 %v460
    %895 = vmatprep.subr.bf16.mxu0 %v465
    %896 = vmatpush1.bf16.msra.mxu0 %v464
    %897 = vmatprep.subr.bf16.mxu0 %v469
    %898 = vmatpush1.bf16.msra.mxu0 %v468
    %899 = vmatprep.subr.bf16.mxu0 %v473
    %900 = vmatpush1.bf16.msra.mxu0 %v472
    %901 = vmatprep.subr.bf16.mxu0 %v477
    %902 = vmatpush1.bf16.msra.mxu0 %v476
    %903 = vmatprep.subr.bf16.mxu0 %v481
    %904 = vmatpush1.bf16.msra.mxu0 %v480
    %905 = vmatprep.subr.bf16.mxu0 %v485
    %906 = vmatpush1.bf16.msra.mxu0 %v484
    %907 = vmatprep.subr.bf16.mxu0 %v489
    %908 = vmatpush1.bf16.msra.mxu0 %v488
    %909 = vmatprep.subr.bf16.mxu0 0
    %910 = vmatpush1.bf16.msra.mxu0 0
    %911 = vmatprep.subr.bf16.mxu0 0
    %912 = vmatpush1.bf16.msra.mxu0 0
    %913 = vmatprep.subr.bf16.mxu0 0
    %914 = vmatpush1.bf16.msra.mxu0 0
    %915 = vmatprep.subr.bf16.mxu0 0
    %916 = vmatpush1.bf16.msra.mxu0 0
    %917 = vmatprep.subr.bf16.mxu0 0
    %918 = vmatpush1.bf16.msra.mxu0 0
    %919 = vmatprep.subr.bf16.mxu0 0
    %920 = vmatpush1.bf16.msra.mxu0 0
    %921 = vmatprep.subr.bf16.mxu0 0
    %922 = vmatpush1.bf16.msra.mxu0 0
    %923 = vmatprep.subr.bf16.mxu0 0
    %924 = vmatpush1.bf16.msra.mxu0 0
    %925 = vmatprep.mubr.bf16.mxu0 0
    %926 = vmatmul.mubr.bf16.gmra.mrb[0].mxu0 %v851
    %v927 = vpop.f32.mrb[0].mxu0
    %v928 = vadd.f32 0.0, %v927
    %v929 = vpop.f32.mrb[0].mxu0
    %v930 = vadd.f32 0.0, %v929
    %v931 = vpop.f32.mrb[0].mxu0
    %v932 = vpop.f32.mrb[0].mxu0
    %933 = vdwg.mxu0
    %v934 = vadd.f32 %v847, %v887
    %v935 = vadd.f32 %v848, %v889
    %v936 = vadd.f32 %v849, %v928
    %v937 = vadd.f32 %v850, %v930
    %v938 = vmul.f32 %v934, 0.5
    %v939 = vtanh.pop %v938
    %v940 = vmul.f32 %v939, 0.5
    %v941 = vadd.f32 %v940, 0.5
    %v942 = vtanh.pop %v936
    %v943 = vmul.f32 %v937, 0.5
    %v944 = vtanh.pop %v943
    %v945 = vmul.f32 %v944, 0.5
    %v946 = vadd.f32 %v945, 0.5
    %v947 = vmul.f32 %v935, 0.5
    %v948 = vtanh.pop %v947
    %v949 = vmul.f32 %v948, 0.5
    %v950 = vadd.f32 %v949, 0.5
    %v951 = vmul.f32 %v950, %v843
    %v952 = vmul.f32 %v941, %v942
    %v953 = vadd.f32 %v951, %v952
    %v954 = vtanh.pop %v953
    %v955 = vmul.f32 %v946, %v954
    %s956 = scalar_lea.vmem [#allocation2], 160
    %v957 = vld [vmem:[%s956] sm:$0xff]
    %v958 = vld [vmem:[%s956 + $0x8] sm:$0xff]
    %v959 = vld [vmem:[%s956 + $0x10] sm:$0xff]
    %v960 = vld [vmem:[%s956 + $0x18] sm:$0xff]
    %v961 = vpack.c.bf16 %v955, %v955
    %962 = vmatprep.subr.bf16.mxu0 %v459
    %963 = vmatpush1.bf16.msra.mxu0 %v458
    %964 = vmatprep.subr.bf16.mxu0 %v463
    %965 = vmatpush1.bf16.msra.mxu0 %v462
    %966 = vmatprep.subr.bf16.mxu0 %v467
    %967 = vmatpush1.bf16.msra.mxu0 %v466
    %968 = vmatprep.subr.bf16.mxu0 %v471
    %969 = vmatpush1.bf16.msra.mxu0 %v470
    %970 = vmatprep.subr.bf16.mxu0 %v475
    %971 = vmatpush1.bf16.msra.mxu0 %v474
    %972 = vmatprep.subr.bf16.mxu0 %v479
    %973 = vmatpush1.bf16.msra.mxu0 %v478
    %974 = vmatprep.subr.bf16.mxu0 %v483
    %975 = vmatpush1.bf16.msra.mxu0 %v482
    %976 = vmatprep.subr.bf16.mxu0 %v487
    %977 = vmatpush1.bf16.msra.mxu0 %v486
    %978 = vmatprep.subr.bf16.mxu0 0
    %979 = vmatpush1.bf16.msra.mxu0 0
    %980 = vmatprep.subr.bf16.mxu0 0
    %981 = vmatpush1.bf16.msra.mxu0 0
    %982 = vmatprep.subr.bf16.mxu0 0
    %983 = vmatpush1.bf16.msra.mxu0 0
    %984 = vmatprep.subr.bf16.mxu0 0
    %985 = vmatpush1.bf16.msra.mxu0 0
    %986 = vmatprep.subr.bf16.mxu0 0
    %987 = vmatpush1.bf16.msra.mxu0 0
    %988 = vmatprep.subr.bf16.mxu0 0
    %989 = vmatpush1.bf16.msra.mxu0 0
    %990 = vmatprep.subr.bf16.mxu0 0
    %991 = vmatpush1.bf16.msra.mxu0 0
    %992 = vmatprep.subr.bf16.mxu0 0
    %993 = vmatpush1.bf16.msra.mxu0 0
    %994 = vmatprep.mubr.bf16.mxu0 0
    %995 = vmatmul.mubr.bf16.gmra.mrb[0].mxu0 %v961
    %v996 = vpop.f32.mrb[0].mxu0
    %v997 = vadd.f32 0.0, %v996
    %v998 = vpop.f32.mrb[0].mxu0
    %v999 = vadd.f32 0.0, %v998
    %v1000 = vpop.f32.mrb[0].mxu0
    %v1001 = vpop.f32.mrb[0].mxu0
    %1002 = vdwg.mxu0
    %1003 = vmatprep.subr.bf16.mxu0 %v461
    %1004 = vmatpush1.bf16.msra.mxu0 %v460
    %1005 = vmatprep.subr.bf16.mxu0 %v465
    %1006 = vmatpush1.bf16.msra.mxu0 %v464
    %1007 = vmatprep.subr.bf16.mxu0 %v469
    %1008 = vmatpush1.bf16.msra.mxu0 %v468
    %1009 = vmatprep.subr.bf16.mxu0 %v473
    %1010 = vmatpush1.bf16.msra.mxu0 %v472
    %1011 = vmatprep.subr.bf16.mxu0 %v477
    %1012 = vmatpush1.bf16.msra.mxu0 %v476
    %1013 = vmatprep.subr.bf16.mxu0 %v481
    %1014 = vmatpush1.bf16.msra.mxu0 %v480
    %1015 = vmatprep.subr.bf16.mxu0 %v485
    %1016 = vmatpush1.bf16.msra.mxu0 %v484
    %1017 = vmatprep.subr.bf16.mxu0 %v489
    %1018 = vmatpush1.bf16.msra.mxu0 %v488
    %1019 = vmatprep.subr.bf16.mxu0 0
    %1020 = vmatpush1.bf16.msra.mxu0 0
    %1021 = vmatprep.subr.bf16.mxu0 0
    %1022 = vmatpush1.bf16.msra.mxu0 0
    %1023 = vmatprep.subr.bf16.mxu0 0
    %1024 = vmatpush1.bf16.msra.mxu0 0
    %1025 = vmatprep.subr.bf16.mxu0 0
    %1026 = vmatpush1.bf16.msra.mxu0 0
    %1027 = vmatprep.subr.bf16.mxu0 0
    %1028 = vmatpush1.bf16.msra.mxu0 0
    %1029 = vmatprep.subr.bf16.mxu0 0
    %1030 = vmatpush1.bf16.msra.mxu0 0
    %1031 = vmatprep.subr.bf16.mxu0 0
    %1032 = vmatpush1.bf16.msra.mxu0 0
    %1033 = vmatprep.subr.bf16.mxu0 0
    %1034 = vmatpush1.bf16.msra.mxu0 0
    %1035 = vmatprep.mubr.bf16.mxu0 0
    %1036 = vmatmul.mubr.bf16.gmra.mrb[0].mxu0 %v961
    %v1037 = vpop.f32.mrb[0].mxu0
    %v1038 = vadd.f32 0.0, %v1037
    %v1039 = vpop.f32.mrb[0].mxu0
    %v1040 = vadd.f32 0.0, %v1039
    %v1041 = vpop.f32.mrb[0].mxu0
    %v1042 = vpop.f32.mrb[0].mxu0
    %1043 = vdwg.mxu0
    %v1044 = vadd.f32 %v957, %v997
    %v1045 = vadd.f32 %v958, %v999
    %v1046 = vadd.f32 %v959, %v1038
    %v1047 = vadd.f32 %v960, %v1040
    %v1048 = vmul.f32 %v1044, 0.5
    %v1049 = vtanh.pop %v1048
    %v1050 = vmul.f32 %v1049, 0.5
    %v1051 = vadd.f32 %v1050, 0.5
    %v1052 = vtanh.pop %v1046
    %v1053 = vmul.f32 %v1047, 0.5
    %v1054 = vtanh.pop %v1053
    %v1055 = vmul.f32 %v1054, 0.5
    %v1056 = vadd.f32 %v1055, 0.5
    %v1057 = vmul.f32 %v1045, 0.5
    %v1058 = vtanh.pop %v1057
    %v1059 = vmul.f32 %v1058, 0.5
    %v1060 = vadd.f32 %v1059, 0.5
    %v1061 = vmul.f32 %v1060, %v953
    %v1062 = vmul.f32 %v1051, %v1052
    %v1063 = vadd.f32 %v1061, %v1062
    %v1064 = vtanh.pop %v1063
    %v1065 = vmul.f32 %v1056, %v1064
    %s1066 = scalar_lea.vmem [#allocation2], 192
    %v1067 = vld [vmem:[%s1066] sm:$0xff]
    %v1068 = vld [vmem:[%s1066 + $0x8] sm:$0xff]
    %v1069 = vld [vmem:[%s1066 + $0x10] sm:$0xff]
    %v1070 = vld [vmem:[%s1066 + $0x18] sm:$0xff]
    %v1071 = vpack.c.bf16 %v1065, %v1065
    %1072 = vmatprep.subr.bf16.mxu0 %v459
    %1073 = vmatpush1.bf16.msra.mxu0 %v458
    %1074 = vmatprep.subr.bf16.mxu0 %v463
    %1075 = vmatpush1.bf16.msra.mxu0 %v462
    %1076 = vmatprep.subr.bf16.mxu0 %v467
    %1077 = vmatpush1.bf16.msra.mxu0 %v466
    %1078 = vmatprep.subr.bf16.mxu0 %v471
    %1079 = vmatpush1.bf16.msra.mxu0 %v470
    %1080 = vmatprep.subr.bf16.mxu0 %v475
    %1081 = vmatpush1.bf16.msra.mxu0 %v474
    %1082 = vmatprep.subr.bf16.mxu0 %v479
    %1083 = vmatpush1.bf16.msra.mxu0 %v478
    %1084 = vmatprep.subr.bf16.mxu0 %v483
    %1085 = vmatpush1.bf16.msra.mxu0 %v482
    %1086 = vmatprep.subr.bf16.mxu0 %v487
    %1087 = vmatpush1.bf16.msra.mxu0 %v486
    %1088 = vmatprep.subr.bf16.mxu0 0
    %1089 = vmatpush1.bf16.msra.mxu0 0
    %1090 = vmatprep.subr.bf16.mxu0 0
    %1091 = vmatpush1.bf16.msra.mxu0 0
    %1092 = vmatprep.subr.bf16.mxu0 0
    %1093 = vmatpush1.bf16.msra.mxu0 0
    %1094 = vmatprep.subr.bf16.mxu0 0
    %1095 = vmatpush1.bf16.msra.mxu0 0
    %1096 = vmatprep.subr.bf16.mxu0 0
    %1097 = vmatpush1.bf16.msra.mxu0 0
    %1098 = vmatprep.subr.bf16.mxu0 0
    %1099 = vmatpush1.bf16.msra.mxu0 0
    %1100 = vmatprep.subr.bf16.mxu0 0
    %1101 = vmatpush1.bf16.msra.mxu0 0
    %1102 = vmatprep.subr.bf16.mxu0 0
    %1103 = vmatpush1.bf16.msra.mxu0 0
    %1104 = vmatprep.mubr.bf16.mxu0 0
    %1105 = vmatmul.mubr.bf16.gmra.mrb[0].mxu0 %v1071
    %v1106 = vpop.f32.mrb[0].mxu0
    %v1107 = vadd.f32 0.0, %v1106
    %v1108 = vpop.f32.mrb[0].mxu0
    %v1109 = vadd.f32 0.0, %v1108
    %v1110 = vpop.f32.mrb[0].mxu0
    %v1111 = vpop.f32.mrb[0].mxu0
    %1112 = vdwg.mxu0
    %1113 = vmatprep.subr.bf16.mxu0 %v461
    %1114 = vmatpush1.bf16.msra.mxu0 %v460
    %1115 = vmatprep.subr.bf16.mxu0 %v465
    %1116 = vmatpush1.bf16.msra.mxu0 %v464
    %1117 = vmatprep.subr.bf16.mxu0 %v469
    %1118 = vmatpush1.bf16.msra.mxu0 %v468
    %1119 = vmatprep.subr.bf16.mxu0 %v473
    %1120 = vmatpush1.bf16.msra.mxu0 %v472
    %1121 = vmatprep.subr.bf16.mxu0 %v477
    %1122 = vmatpush1.bf16.msra.mxu0 %v476
    %1123 = vmatprep.subr.bf16.mxu0 %v481
    %1124 = vmatpush1.bf16.msra.mxu0 %v480
    %1125 = vmatprep.subr.bf16.mxu0 %v485
    %1126 = vmatpush1.bf16.msra.mxu0 %v484
    %1127 = vmatprep.subr.bf16.mxu0 %v489
    %1128 = vmatpush1.bf16.msra.mxu0 %v488
    %1129 = vmatprep.subr.bf16.mxu0 0
    %1130 = vmatpush1.bf16.msra.mxu0 0
    %1131 = vmatprep.subr.bf16.mxu0 0
    %1132 = vmatpush1.bf16.msra.mxu0 0
    %1133 = vmatprep.subr.bf16.mxu0 0
    %1134 = vmatpush1.bf16.msra.mxu0 0
    %1135 = vmatprep.subr.bf16.mxu0 0
    %1136 = vmatpush1.bf16.msra.mxu0 0
    %1137 = vmatprep.subr.bf16.mxu0 0
    %1138 = vmatpush1.bf16.msra.mxu0 0
    %1139 = vmatprep.subr.bf16.mxu0 0
    %1140 = vmatpush1.bf16.msra.mxu0 0
    %1141 = vmatprep.subr.bf16.mxu0 0
    %1142 = vmatpush1.bf16.msra.mxu0 0
    %1143 = vmatprep.subr.bf16.mxu0 0
    %1144 = vmatpush1.bf16.msra.mxu0 0
    %1145 = vmatprep.mubr.bf16.mxu0 0
    %1146 = vmatmul.mubr.bf16.gmra.mrb[0].mxu0 %v1071
    %v1147 = vpop.f32.mrb[0].mxu0
    %v1148 = vadd.f32 0.0, %v1147
    %v1149 = vpop.f32.mrb[0].mxu0
    %v1150 = vadd.f32 0.0, %v1149
    %v1151 = vpop.f32.mrb[0].mxu0
    %v1152 = vpop.f32.mrb[0].mxu0
    %1153 = vdwg.mxu0
    %v1154 = vadd.f32 %v1067, %v1107
    %v1155 = vadd.f32 %v1068, %v1109
    %v1156 = vadd.f32 %v1069, %v1148
    %v1157 = vadd.f32 %v1070, %v1150
    %v1158 = vmul.f32 %v1154, 0.5
    %v1159 = vtanh.pop %v1158
    %v1160 = vmul.f32 %v1159, 0.5
    %v1161 = vadd.f32 %v1160, 0.5
    %v1162 = vtanh.pop %v1156
    %v1163 = vmul.f32 %v1157, 0.5
    %v1164 = vtanh.pop %v1163
    %v1165 = vmul.f32 %v1164, 0.5
    %v1166 = vadd.f32 %v1165, 0.5
    %v1167 = vmul.f32 %v1155, 0.5
    %v1168 = vtanh.pop %v1167
    %v1169 = vmul.f32 %v1168, 0.5
    %v1170 = vadd.f32 %v1169, 0.5
    %v1171 = vmul.f32 %v1170, %v1063
    %v1172 = vmul.f32 %v1161, %v1162
    %v1173 = vadd.f32 %v1171, %v1172
    %v1174 = vtanh.pop %v1173
    %v1175 = vmul.f32 %v1166, %v1174
    %s1176 = scalar_lea.vmem [#allocation2], 224
    %v1177 = vld [vmem:[%s1176] sm:$0xff]
    %v1178 = vld [vmem:[%s1176 + $0x8] sm:$0xff]
    %v1179 = vld [vmem:[%s1176 + $0x10] sm:$0xff]
    %v1180 = vld [vmem:[%s1176 + $0x18] sm:$0xff]
    %v1181 = vpack.c.bf16 %v1175, %v1175
    %1182 = vmatprep.subr.bf16.mxu0 %v459
    %1183 = vmatpush1.bf16.msra.mxu0 %v458
    %1184 = vmatprep.subr.bf16.mxu0 %v463
    %1185 = vmatpush1.bf16.msra.mxu0 %v462
    %1186 = vmatprep.subr.bf16.mxu0 %v467
    %1187 = vmatpush1.bf16.msra.mxu0 %v466
    %1188 = vmatprep.subr.bf16.mxu0 %v471
    %1189 = vmatpush1.bf16.msra.mxu0 %v470
    %1190 = vmatprep.subr.bf16.mxu0 %v475
    %1191 = vmatpush1.bf16.msra.mxu0 %v474
    %1192 = vmatprep.subr.bf16.mxu0 %v479
    %1193 = vmatpush1.bf16.msra.mxu0 %v478
    %1194 = vmatprep.subr.bf16.mxu0 %v483
    %1195 = vmatpush1.bf16.msra.mxu0 %v482
    %1196 = vmatprep.subr.bf16.mxu0 %v487
    %1197 = vmatpush1.bf16.msra.mxu0 %v486
    %1198 = vmatprep.subr.bf16.mxu0 0
    %1199 = vmatpush1.bf16.msra.mxu0 0
    %1200 = vmatprep.subr.bf16.mxu0 0
    %1201 = vmatpush1.bf16.msra.mxu0 0
    %1202 = vmatprep.subr.bf16.mxu0 0
    %1203 = vmatpush1.bf16.msra.mxu0 0
    %1204 = vmatprep.subr.bf16.mxu0 0
    %1205 = vmatpush1.bf16.msra.mxu0 0
    %1206 = vmatprep.subr.bf16.mxu0 0
    %1207 = vmatpush1.bf16.msra.mxu0 0
    %1208 = vmatprep.subr.bf16.mxu0 0
    %1209 = vmatpush1.bf16.msra.mxu0 0
    %1210 = vmatprep.subr.bf16.mxu0 0
    %1211 = vmatpush1.bf16.msra.mxu0 0
    %1212 = vmatprep.subr.bf16.mxu0 0
    %1213 = vmatpush1.bf16.msra.mxu0 0
    %1214 = vmatprep.mubr.bf16.mxu0 0
    %1215 = vmatmul.mubr.bf16.gmra.mrb[0].mxu0 %v1181
    %v1216 = vpop.f32.mrb[0].mxu0
    %v1217 = vadd.f32 0.0, %v1216
    %v1218 = vpop.f32.mrb[0].mxu0
    %v1219 = vadd.f32 0.0, %v1218
    %v1220 = vpop.f32.mrb[0].mxu0
    %v1221 = vpop.f32.mrb[0].mxu0
    %1222 = vdwg.mxu0
    %1223 = vmatprep.subr.bf16.mxu0 %v461
    %1224 = vmatpush1.bf16.msra.mxu0 %v460
    %1225 = vmatprep.subr.bf16.mxu0 %v465
    %1226 = vmatpush1.bf16.msra.mxu0 %v464
    %1227 = vmatprep.subr.bf16.mxu0 %v469
    %1228 = vmatpush1.bf16.msra.mxu0 %v468
    %1229 = vmatprep.subr.bf16.mxu0 %v473
    %1230 = vmatpush1.bf16.msra.mxu0 %v472
    %1231 = vmatprep.subr.bf16.mxu0 %v477
    %1232 = vmatpush1.bf16.msra.mxu0 %v476
    %1233 = vmatprep.subr.bf16.mxu0 %v481
    %1234 = vmatpush1.bf16.msra.mxu0 %v480
    %1235 = vmatprep.subr.bf16.mxu0 %v485
    %1236 = vmatpush1.bf16.msra.mxu0 %v484
    %1237 = vmatprep.subr.bf16.mxu0 %v489
    %1238 = vmatpush1.bf16.msra.mxu0 %v488
    %1239 = vmatprep.subr.bf16.mxu0 0
    %1240 = vmatpush1.bf16.msra.mxu0 0
    %1241 = vmatprep.subr.bf16.mxu0 0
    %1242 = vmatpush1.bf16.msra.mxu0 0
    %1243 = vmatprep.subr.bf16.mxu0 0
    %1244 = vmatpush1.bf16.msra.mxu0 0
    %1245 = vmatprep.subr.bf16.mxu0 0
    %1246 = vmatpush1.bf16.msra.mxu0 0
    %1247 = vmatprep.subr.bf16.mxu0 0
    %1248 = vmatpush1.bf16.msra.mxu0 0
    %1249 = vmatprep.subr.bf16.mxu0 0
    %1250 = vmatpush1.bf16.msra.mxu0 0
    %1251 = vmatprep.subr.bf16.mxu0 0
    %1252 = vmatpush1.bf16.msra.mxu0 0
    %1253 = vmatprep.subr.bf16.mxu0 0
    %1254 = vmatpush1.bf16.msra.mxu0 0
    %1255 = vmatprep.mubr.bf16.mxu0 0
    %1256 = vmatmul.mubr.bf16.gmra.mrb[0].mxu0 %v1181
    %v1257 = vpop.f32.mrb[0].mxu0
    %v1258 = vadd.f32 0.0, %v1257
    %v1259 = vpop.f32.mrb[0].mxu0
    %v1260 = vadd.f32 0.0, %v1259
    %v1261 = vpop.f32.mrb[0].mxu0
    %v1262 = vpop.f32.mrb[0].mxu0
    %1263 = vdwg.mxu0
    %v1264 = vadd.f32 %v1177, %v1217
    %v1265 = vadd.f32 %v1178, %v1219
    %v1266 = vadd.f32 %v1179, %v1258
    %v1267 = vadd.f32 %v1180, %v1260
    %v1268 = vmul.f32 %v1264, 0.5
    %v1269 = vtanh.pop %v1268
    %v1270 = vmul.f32 %v1269, 0.5
    %v1271 = vadd.f32 %v1270, 0.5
    %v1272 = vtanh.pop %v1266
    %v1273 = vmul.f32 %v1267, 0.5
    %v1274 = vtanh.pop %v1273
    %v1275 = vmul.f32 %v1274, 0.5
    %v1276 = vadd.f32 %v1275, 0.5
    %v1277 = vmul.f32 %v1265, 0.5
    %v1278 = vtanh.pop %v1277
    %v1279 = vmul.f32 %v1278, 0.5
    %v1280 = vadd.f32 %v1279, 0.5
    %v1281 = vmul.f32 %v1280, %v1173
    %v1282 = vmul.f32 %v1271, %v1272
    %v1283 = vadd.f32 %v1281, %v1282
    %v1284 = vtanh.pop %v1283
    %v1285 = vmul.f32 %v1276, %v1284
    %v1286 = vpack.c.bf16 %v1285, %v1285
    %v1287 = vld [vmem:[#allocation9] sm:$0xf]
    %v1288 = vld [vmem:[#allocation9 + $0x4] sm:$0xf]
    %v1289 = vld [vmem:[#allocation9 + $0x8] sm:$0xf]
    %v1290 = vld [vmem:[#allocation9 + $0xc] sm:$0xf]
    %v1291 = vld [vmem:[#allocation9 + $0x10] sm:$0xf]
    %v1292 = vld [vmem:[#allocation9 + $0x14] sm:$0xf]
    %v1293 = vld [vmem:[#allocation9 + $0x18] sm:$0xf]
    %v1294 = vld [vmem:[#allocation9 + $0x1c] sm:$0xf]
    %v1295 = vld [vmem:[#allocation9 + $0x20] sm:$0xf]
    %v1296 = vld [vmem:[#allocation9 + $0x24] sm:$0xf]
    %v1297 = vld [vmem:[#allocation9 + $0x28] sm:$0xf]
    %v1298 = vld [vmem:[#allocation9 + $0x2c] sm:$0xf]
    %v1299 = vld [vmem:[#allocation9 + $0x30] sm:$0xf]
    %v1300 = vld [vmem:[#allocation9 + $0x34] sm:$0xf]
    %v1301 = vld [vmem:[#allocation9 + $0x38] sm:$0xf]
    %v1302 = vld [vmem:[#allocation9 + $0x3c] sm:$0xf]
    %v1303 = vld [vmem:[%s5] sm:$0x1]
    %v1305 = vlaneseq
    %v1306 = vshrl.u32 %v1305, 7
    %v1307 = vsub.s32 0, %v1306
    %v1308 = vrot.slane %v1303, %v1307
    %v1326 = vunpack.c.l.b16 %v1287
    %v1327 = vunpack.c.l.b16 %v1288
    %v1328 = vunpack.c.l.b16 %v1289
    %v1329 = vunpack.c.l.b16 %v1290
    %v1330 = vunpack.c.l.b16 %v1291
    %v1331 = vunpack.c.l.b16 %v1292
    %v1332 = vunpack.c.l.b16 %v1293
    %v1333 = vunpack.c.l.b16 %v1294
    %v1334 = vunpack.c.l.b16 %v1295
    %v1335 = vunpack.c.l.b16 %v1296
    %v1336 = vunpack.c.l.b16 %v1297
    %v1337 = vunpack.c.l.b16 %v1298
    %v1338 = vunpack.c.l.b16 %v1299
    %v1339 = vunpack.c.l.b16 %v1300
    %v1340 = vunpack.c.l.b16 %v1301
    %v1341 = vunpack.c.l.b16 %v1302
    %v1342 = vpack.c.b16 %v1327, %v1326
    %v1343 = vpack.c.b16 %v1329, %v1328
    %v1344 = vpack.c.b16 %v1331, %v1330
    %v1345 = vpack.c.b16 %v1333, %v1332
    %v1346 = vpack.c.b16 %v1335, %v1334
    %v1347 = vpack.c.b16 %v1337, %v1336
    %v1348 = vpack.c.b16 %v1339, %v1338
    %v1349 = vpack.c.b16 %v1341, %v1340
    %1358 = vmatprep.subr.bf16.mxu0 0
    %1359 = vmatpush1.bf16.msra.mxu0 %v1342
    %1360 = vmatprep.subr.bf16.mxu0 0
    %1361 = vmatpush1.bf16.msra.mxu0 %v1343
    %1362 = vmatprep.subr.bf16.mxu0 0
    %1363 = vmatpush1.bf16.msra.mxu0 %v1344
    %1364 = vmatprep.subr.bf16.mxu0 0
    %1365 = vmatpush1.bf16.msra.mxu0 %v1345
    %1366 = vmatprep.subr.bf16.mxu0 0
    %1367 = vmatpush1.bf16.msra.mxu0 %v1346
    %1368 = vmatprep.subr.bf16.mxu0 0
    %1369 = vmatpush1.bf16.msra.mxu0 %v1347
    %1370 = vmatprep.subr.bf16.mxu0 0
    %1371 = vmatpush1.bf16.msra.mxu0 %v1348
    %1372 = vmatprep.subr.bf16.mxu0 0
    %1373 = vmatpush1.bf16.msra.mxu0 %v1349
    %1374 = vmatprep.subr.bf16.mxu0 0
    %1375 = vmatpush1.bf16.msra.mxu0 0
    %1376 = vmatprep.subr.bf16.mxu0 0
    %1377 = vmatpush1.bf16.msra.mxu0 0
    %1378 = vmatprep.subr.bf16.mxu0 0
    %1379 = vmatpush1.bf16.msra.mxu0 0
    %1380 = vmatprep.subr.bf16.mxu0 0
    %1381 = vmatpush1.bf16.msra.mxu0 0
    %1382 = vmatprep.subr.bf16.mxu0 0
    %1383 = vmatpush1.bf16.msra.mxu0 0
    %1384 = vmatprep.subr.bf16.mxu0 0
    %1385 = vmatpush1.bf16.msra.mxu0 0
    %1386 = vmatprep.subr.bf16.mxu0 0
    %1387 = vmatpush1.bf16.msra.mxu0 0
    %1388 = vmatprep.subr.bf16.mxu0 0
    %1389 = vmatpush1.bf16.msra.mxu0 0
    %1390 = vmatprep.mubr.bf16.mxu0 0
    %1391 = vmatmul.mubr.bf16.gmra.mrb[0].mxu0 %v1286
    %v1392 = vpop.f32.mrb[0].mxu0
    %v1393 = vadd.f32 %v1308, %v1392
    %v1394 = vpop.f32.mrb[0].mxu0
    %v1395 = vpop.f32.mrb[0].mxu0
    %v1396 = vpop.f32.mrb[0].mxu0
    %1397 = vdwg.mxu0
    %1398 = vmax.xlane.f32.xlu0 %v1393
    %v1399 = vpop.xlane.xlu0 %1398
    %v1400 = vsub.f32 %v1393, %v1399
    %v1401 = vmul.f32 %v1400, 1.442695
    %v1402 = vpow.pop %v1401
    %1403 = vadd.xlane.f32.xlu0 %v1402
    %v1404 = vpop.xlane.xlu0 %1403
    %v1405 = vrcp.pop %v1404
    %v1406 = vmul.f32 %v1402, %v1405
    %1407 = vst [vmem:[#allocation11] sm:$0xff] %v1406
    %1408 = vst [vmem:[#allocation12] sm:$0xff] %v1285
    %1409 = vst [vmem:[#allocation14] sm:$0xff] %v1283
    // Predicated region
    $region42: #{tpu_custom_call.1} parent=1 // pred_check
      _
    $region43: #{tpu_custom_call.1} parent=1 // pred_check_branch
      %1411 = sbr.rel (0) target = $region45
    $region44: #{tpu_custom_call.1} parent=1 // pred_region
      %s1413 = ssub.s32 128, 128
      %1414 = vsyncadd [#allocation5], %s1413
      %s1416 = sshll.u32 [#allocation11], 4
      %s1417 = int_to_ptr.vmem [resolvable:$true] %s1416
      %1419 = dma.vmem_to_hbm [thread:$0]  %s1417, 128, %s6, [#allocation5]
    $region45: #{tpu_custom_call.1} parent=1 // pred_fallthru
      _
    // Predicated region
    $region46: #{tpu_custom_call.1} parent=1 // pred_check
      _
    $region47: #{tpu_custom_call.1} parent=1 // pred_check_branch
      %1421 = sbr.rel (0) target = $region49
    $region48: #{tpu_custom_call.1} parent=1 // pred_region
      %s1423 = ssub.s32 128, 128
      %1424 = vsyncadd [#allocation13], %s1423
      %s1426 = sshll.u32 [#allocation12], 4
      %s1427 = int_to_ptr.vmem [resolvable:$true] %s1426
      %1429 = dma.vmem_to_hbm [thread:$0]  %s1427, 128, %s7, [#allocation13]
    $region49: #{tpu_custom_call.1} parent=1 // pred_fallthru
      _
    // Predicated region
    $region50: #{tpu_custom_call.1} parent=1 // pred_check
      _
    $region51: #{tpu_custom_call.1} parent=1 // pred_check_branch
      %1431 = sbr.rel (0) target = $region53
    $region52: #{tpu_custom_call.1} parent=1 // pred_region
      %s1433 = ssub.s32 128, 128
      %1434 = vsyncadd [#allocation13], %s1433
      %s1436 = sshll.u32 [#allocation14], 4
      %s1437 = int_to_ptr.vmem [resolvable:$true] %s1436
      %1439 = dma.vmem_to_hbm [thread:$0]  %s1437, 128, %s8, [#allocation13]
    $region53: #{tpu_custom_call.1} parent=1 // pred_fallthru
      _
    // Predicated region
    $region54: #{tpu_custom_call.1} parent=1 // pred_check
      _
    $region55: #{tpu_custom_call.1} parent=1 // pred_check_branch
      %1441 = sbr.rel (0) target = $region57
    $region56: #{tpu_custom_call.1} parent=1 // pred_region
      %1442 = dma.done [#allocation5], 128
    $region57: #{tpu_custom_call.1} parent=1 // pred_fallthru
      _
    // Predicated region
    $region58: #{tpu_custom_call.1} parent=1 // pred_check
      _
    $region59: #{tpu_custom_call.1} parent=1 // pred_check_branch
      %1444 = sbr.rel (0) target = $region61
    $region60: #{tpu_custom_call.1} parent=1 // pred_region
      %1445 = dma.done [#allocation13], 128
    $region61: #{tpu_custom_call.1} parent=1 // pred_fallthru
      _
    // Predicated region
    $region62: #{tpu_custom_call.1} parent=1 // pred_check
      _
    $region63: #{tpu_custom_call.1} parent=1 // pred_check_branch
      %1447 = sbr.rel (0) target = $region65
    $region64: #{tpu_custom_call.1} parent=1 // pred_region
      %1448 = dma.done [#allocation13], 128
    $region65: #{tpu_custom_call.1} parent=1 // pred_fallthru
      _
    %1449 = vsyncpa [#allocation4], 1
    %1450 = vsyncpa [#allocation7], 1
    %1451 = vsyncpa [#allocation10], 1
    %1452 = vsyncpa [#allocation5], 1
    %1453 = vsyncpa [#allocation13], 1

</llo_original>
